<compile_context>
chip_gen: v6e
topology: v6e:2x2x1
jax: 0.10.0
libtpu: 0.0.40
codegen_flags: <defaults>
</compile_context>

<pallas_src>
import numpy as np
import jax
import jax.numpy as jnp
from jax.experimental import pallas as pl
from jax.experimental.pallas import tpu as pltpu


# ---------------------------------------------------------------------------
# Pallas kernel: hoisted input projection + LSTM recurrence + fc1/fc2 head.
# Gate column order inside the kernel is (i, f, o, g) -- see _permute_gates.
# ---------------------------------------------------------------------------
def lstm_head_kernel(x_ref, wih_ref, whh_ref, b_ref,
                     w1_ref, b1_ref, w2_ref, b2_ref, out_ref, xg_ref):
    T, B, E4 = x_ref.shape
    H = whh_ref.shape[0]

    # ---- hoisted input projection: ONE (T*B, 4E) @ (4E, 4H) matmul + bias ----
    x2d = x_ref[...].reshape(T * B, E4)                              # bf16
    xg = (jnp.dot(x2d, wih_ref[...], preferred_element_type=jnp.float32)
          + b_ref[...])                                              # f32
    xg_ref[...] = xg.reshape(T, B, 4 * H)

    whh = whh_ref[...]                                               # hoisted: no per-step reload

    def step(t, carry):
        h, c = carry
        gates = xg_ref[t] + jnp.dot(h, whh,
                                    preferred_element_type=jnp.float32)
        # gate layout (i, f, o, g): one contiguous sigmoid slab + one tanh slab
        sig = jax.nn.sigmoid(gates[:, 0:3 * H])
        i_g = sig[:, 0:H]
        f_g = sig[:, H:2 * H]
        o_g = sig[:, 2 * H:3 * H]
        g_g = jnp.tanh(gates[:, 3 * H:4 * H])
        c_new = f_g * c + i_g * g_g
        h_new = o_g * jnp.tanh(c_new)
        return (h_new, c_new)

    h0 = jnp.zeros((B, H), jnp.float32)
    c0 = jnp.zeros((B, H), jnp.float32)
    h_last, _ = jax.lax.fori_loop(0, T, step, (h0, c0), unroll=True)

    # fc1 -> relu -> fc2 -> sigmoid (dropout is identity at inference).
    # fc2 weights are pre-padded to 128 output lanes -> unmasked final store.
    z1 = jnp.maximum(
        jnp.dot(h_last, w1_ref[...], preferred_element_type=jnp.float32)
        + b1_ref[...], 0.0)
    z2 = (jnp.dot(z1, w2_ref[...], preferred_element_type=jnp.float32)
          + b2_ref[...])
    out_ref[...] = jax.nn.sigmoid(z2)


# ---------------------------------------------------------------------------
# Parameter construction (PyTorch layouts / gate order, synthetic weights)
# ---------------------------------------------------------------------------
def init_params(key, num_clients, num_actions, num_wkns,
                embedding_dim=32, hidden_dim=64):
    E, H = embedding_dim, hidden_dim
    ks = jax.random.split(key, 12)
    s = 0.1
    p = {
        "client_emb": s * jax.random.normal(ks[0], (num_clients, E), jnp.float32),
        "action_emb": s * jax.random.normal(ks[1], (num_actions, E), jnp.float32),
        "wkn_emb":    s * jax.random.normal(ks[2], (num_wkns, E), jnp.float32),
        # nn.Linear(1, E): weight (E,1) kept as (E,) row, plus bias (E,)
        "w_time": s * jax.random.normal(ks[3], (E,), jnp.float32),
        "b_time": s * jax.random.normal(ks[4], (E,), jnp.float32),
        # nn.LSTM: weight_ih (4H,4E), weight_hh (4H,H) stored transposed,
        # gate columns in PyTorch order (i, f, g, o)
        "wih": s * jax.random.normal(ks[5], (4 * E, 4 * H), jnp.float32),
        "whh": s * jax.random.normal(ks[6], (H, 4 * H), jnp.float32),
        # combined bias = b_ih + b_hh
        "b": s * jax.random.normal(ks[7], (1, 4 * H), jnp.float32),
        # fc1: (H, H//2), fc2: (H//2, 1)  (stored as x @ W layouts)
        "w1": s * jax.random.normal(ks[8], (H, H // 2), jnp.float32),
        "b1": s * jax.random.normal(ks[9], (1, H // 2), jnp.float32),
        "w2": s * jax.random.normal(ks[10], (H // 2, 1), jnp.float32),
        "b2": s * jax.random.normal(ks[11], (1, 1), jnp.float32),
    }
    return p


def _permute_gates_ifgo_to_ifog(w, H):
    # PyTorch nn.LSTM packs gate columns as (i, f, g, o); the kernel expects
    # (i, f, o, g) so sigmoid/tanh each act on one contiguous slab.
    i, f, g, o = (w[..., 0:H], w[..., H:2 * H],
                  w[..., 2 * H:3 * H], w[..., 3 * H:4 * H])
    return jnp.concatenate([i, f, o, g], axis=-1)


def _round_up(n, m):
    return ((n + m - 1) // m) * m


# ---------------------------------------------------------------------------
# Forward: JAX glue (gathers, time linear, concat, padding) + Pallas hot path
# ---------------------------------------------------------------------------
def forward(params, client, actions, wkns, times):
    B, T = actions.shape
    E = params["client_emb"].shape[-1]
    H = params["whh"].shape[0]
    H2 = params["w1"].shape[-1]
    OUT_LANES = 128

    # ---- embedding gathers / time linear / concat (plain-JAX glue) ----
    client_emb = params["client_emb"][client]                        # (B, E)
    client_emb = jnp.broadcast_to(client_emb[:, None, :], (B, T, E))
    action_emb = params["action_emb"][actions]                       # (B, T, E)
    wkn_emb = params["wkn_emb"][wkns]                                # (B, T, E)
    time_emb = times[..., None] * params["w_time"] + params["b_time"]  # (B, T, E)
    combined = jnp.concatenate(
        [client_emb, action_emb, wkn_emb, time_emb], axis=-1)        # (B, T, 4E)

    # ---- pad batch to a sublane multiple; tile it for the (parallel) grid ----
    if B <= 128:
        B_pad = max(8, _round_up(B, 8))
    else:
        B_pad = _round_up(B, 128)
    TB = min(B_pad, 128)
    combined = jnp.pad(combined, ((0, B_pad - B), (0, 0), (0, 0)))

    # time-major, bf16 inputs (native MXU path); f32 accumulation in-kernel
    x = jnp.transpose(combined, (1, 0, 2)).astype(jnp.bfloat16)      # (T, B_pad, 4E)

    # ---- weight prep: gate permutation, dtypes, lane-dense fc2 padding ----
    wih = _permute_gates_ifgo_to_ifog(params["wih"], H).astype(jnp.bfloat16)
    whh = _permute_gates_ifgo_to_ifog(params["whh"], H)              # f32
    b = _permute_gates_ifgo_to_ifog(params["b"], H)                  # (1, 4H) f32
    w2p = jnp.zeros((H2, OUT_LANES), jnp.float32).at[:, :1].set(params["w2"])
    b2p = jnp.zeros((1, OUT_LANES), jnp.float32).at[:, :1].set(params["b2"])

    # ---- VMEM budget: resident inputs (double-buffered) + scratch + margin ----
    f32b, bf16b = 4, 2
    resident = (T * TB * 4 * E * bf16b + (4 * E) * (4 * H) * bf16b
                + H * (4 * H) * f32b + (4 * H) * f32b
                + H * H2 * f32b + H2 * f32b
                + H2 * OUT_LANES * f32b + OUT_LANES * f32b
                + TB * OUT_LANES * f32b)
    scratch = T * TB * (4 * H) * f32b
    vmem_limit = int(max(16 * 1024 * 1024,
                         min(2 * (2 * resident + scratch) + (8 << 20),
                             100 << 20)))

    # TODO(synk): for large T*B, stream x from HBM (memory_space=pl.ANY +
    # make_async_copy double-buffering) instead of keeping it VMEM-resident.
    out_full = pl.pallas_call(
        lstm_head_kernel,
        out_shape=jax.ShapeDtypeStruct((B_pad, OUT_LANES), jnp.float32),
        grid=(B_pad // TB,),
        in_specs=[
            pl.BlockSpec((T, TB, 4 * E), lambda i: (0, i, 0)),       # x (bf16)
            pl.BlockSpec((4 * E, 4 * H), lambda i: (0, 0)),          # Wih (bf16)
            pl.BlockSpec((H, 4 * H), lambda i: (0, 0)),              # Whh (f32)
            pl.BlockSpec((1, 4 * H), lambda i: (0, 0)),              # bias
            pl.BlockSpec((H, H2), lambda i: (0, 0)),                 # fc1 W
            pl.BlockSpec((1, H2), lambda i: (0, 0)),                 # fc1 b
            pl.BlockSpec((H2, OUT_LANES), lambda i: (0, 0)),         # fc2 W (lane-padded)
            pl.BlockSpec((1, OUT_LANES), lambda i: (0, 0)),          # fc2 b (lane-padded)
        ],
        out_specs=pl.BlockSpec((TB, OUT_LANES), lambda i: (i, 0)),
        scratch_shapes=[pltpu.VMEM((T, TB, 4 * H), jnp.float32)],    # xg scratch
        compiler_params=pltpu.CompilerParams(
            dimension_semantics=("parallel",),
            vmem_limit_bytes=vmem_limit),
    )(x, wih, whh, b, params["w1"], params["b1"], w2p, b2p)

    return out_full[:B, 0]                                           # (B,)


# ---------------------------------------------------------------------------
# Pure-JAX f32 reference (PyTorch gate order) for a correctness sanity check
# ---------------------------------------------------------------------------
def forward_ref(params, client, actions, wkns, times):
    B, T = actions.shape
    E = params["client_emb"].shape[-1]
    H = params["whh"].shape[0]

    ce = jnp.broadcast_to(params["client_emb"][client][:, None, :], (B, T, E))
    ae = params["action_emb"][actions]
    we = params["wkn_emb"][wkns]
    te = times[..., None] * params["w_time"] + params["b_time"]
    combined = jnp.concatenate([ce, ae, we, te], axis=-1)            # (B, T, 4E)

    def step(carry, x_t):
        h, c = carry
        gates = x_t @ params["wih"] + h @ params["whh"] + params["b"]
        i_g = jax.nn.sigmoid(gates[:, 0:H])
        f_g = jax.nn.sigmoid(gates[:, H:2 * H])
        g_g = jnp.tanh(gates[:, 2 * H:3 * H])
        o_g = jax.nn.sigmoid(gates[:, 3 * H:4 * H])
        c = f_g * c + i_g * g_g
        h = o_g * jnp.tanh(c)
        return (h, c), None

    h0 = jnp.zeros((B, H), jnp.float32)
    c0 = jnp.zeros((B, H), jnp.float32)
    (h_last, _), _ = jax.lax.scan(step, (h0, c0),
                                  jnp.transpose(combined, (1, 0, 2)))
    z1 = jnp.maximum(h_last @ params["w1"] + params["b1"], 0.0)
    z2 = z1 @ params["w2"] + params["b2"]
    return jnp.squeeze(jax.nn.sigmoid(z2))


if __name__ == "__main__":
    # Small shapes consistent with the module's forward signature.
    B, T = 2, 8
    num_clients, num_actions, num_wkns = 10, 12, 6
    E, H = 32, 64

    key = jax.random.PRNGKey(0)
    kp, kc, ka, kw, kt = jax.random.split(key, 5)

    params = init_params(kp, num_clients, num_actions, num_wkns, E, H)
    client = jax.random.randint(kc, (B,), 0, num_clients)
    actions = jax.random.randint(ka, (B, T), 0, num_actions)
    wkns = jax.random.randint(kw, (B, T), 0, num_wkns)
    times = jax.random.uniform(kt, (B, T), jnp.float32)

    out = jax.block_until_ready(forward(params, client, actions, wkns, times))
    ref = jax.block_until_ready(forward_ref(params, client, actions, wkns, times))

    assert out.shape == (B,), f"unexpected output shape {out.shape}"
    # bf16 input-projection operands -> looser (but still tight for sigmoid
    # outputs) tolerance vs the pure-f32 reference.
    assert np.allclose(np.asarray(out), np.asarray(ref), atol=1e-2, rtol=1e-2), \
        f"mismatch: {out} vs {ref}"
    print("KERNEL_OK")
</pallas_src>

<mosaic_0001>
module attributes {stable_mosaic.version = 11 : i64} {
  func.func @lstm_head_kernel(%arg0: i32, %arg1: memref<8x8x128xbf16, #tpu.memory_space<vmem>>, %arg2: memref<128x256xbf16, #tpu.memory_space<vmem>>, %arg3: memref<64x256xf32, #tpu.memory_space<vmem>>, %arg4: memref<1x256xf32, #tpu.memory_space<vmem>>, %arg5: memref<64x32xf32, #tpu.memory_space<vmem>>, %arg6: memref<1x32xf32, #tpu.memory_space<vmem>>, %arg7: memref<32x128xf32, #tpu.memory_space<vmem>>, %arg8: memref<1x128xf32, #tpu.memory_space<vmem>>, %arg9: memref<8x128xf32, #tpu.memory_space<vmem>>, %arg10: memref<8x8x256xf32, #tpu.memory_space<vmem>>) attributes {dimension_semantics = [#tpu.dimension_semantics<parallel>], iteration_bounds = array<i64: 1>, scalar_prefetch = 0 : i64, scratch_operands = 1 : i64, tpu.core_type = #tpu.core_type<tc>, window_params = [{transform_indices = @transform_0, window_bounds = array<i64: 8, 8, 128>}, {pipeline_mode = #tpu.pipeline_mode<synchronous>, transform_indices = @transform_1, window_bounds = array<i64: 128, 256>}, {pipeline_mode = #tpu.pipeline_mode<synchronous>, transform_indices = @transform_2, window_bounds = array<i64: 64, 256>}, {pipeline_mode = #tpu.pipeline_mode<synchronous>, transform_indices = @transform_3, window_bounds = array<i64: 1, 256>}, {pipeline_mode = #tpu.pipeline_mode<synchronous>, transform_indices = @transform_4, window_bounds = array<i64: 64, 32>}, {pipeline_mode = #tpu.pipeline_mode<synchronous>, transform_indices = @transform_5, window_bounds = array<i64: 1, 32>}, {pipeline_mode = #tpu.pipeline_mode<synchronous>, transform_indices = @transform_6, window_bounds = array<i64: 32, 128>}, {pipeline_mode = #tpu.pipeline_mode<synchronous>, transform_indices = @transform_7, window_bounds = array<i64: 1, 128>}, {transform_indices = @transform_8, window_bounds = array<i64: 8, 128>}]} {
    %c0 = arith.constant 0 : index
    %c0_0 = arith.constant 0 : index
    %c0_1 = arith.constant 0 : index
    %0 = vector.load %arg1[%c0, %c0_0, %c0_1] : memref<8x8x128xbf16, #tpu.memory_space<vmem>>, vector<8x8x128xbf16>
    %1 = vector.shape_cast %0 : vector<8x8x128xbf16> to vector<64x128xbf16>
    %c0_2 = arith.constant 0 : index
    %c0_3 = arith.constant 0 : index
    %2 = vector.load %arg2[%c0_2, %c0_3] : memref<128x256xbf16, #tpu.memory_space<vmem>>, vector<128x256xbf16>
    %cst = arith.constant dense<0.000000e+00> : vector<64x256xf32>
    %3 = tpu.matmul %1, %2, %cst {dimension_numbers = #tpu.dot_dimension_numbers<[1], [0], [0], [1], [0, 0, 1, 1], [], []>} : vector<64x128xbf16>, vector<128x256xbf16>, vector<64x256xf32> -> vector<64x256xf32>
    %c0_4 = arith.constant 0 : index
    %c0_5 = arith.constant 0 : index
    %4 = vector.load %arg4[%c0_4, %c0_5] : memref<1x256xf32, #tpu.memory_space<vmem>>, vector<1x256xf32>
    %5 = vector.broadcast %4 : vector<1x256xf32> to vector<64x256xf32>
    %6 = arith.addf %3, %5 : vector<64x256xf32>
    %7 = vector.shape_cast %6 : vector<64x256xf32> to vector<8x8x256xf32>
    %c0_6 = arith.constant 0 : index
    %c0_7 = arith.constant 0 : index
    %c0_8 = arith.constant 0 : index
    %8 = vector.load %arg10[%c0_6, %c0_7, %c0_8] : memref<8x8x256xf32, #tpu.memory_space<vmem>>, vector<8x8x256xf32>
    tpu.vector_store %arg10[%c0_6, %c0_7, %c0_8], %7 {strides = array<i32>} : memref<8x8x256xf32, #tpu.memory_space<vmem>>, vector<8x8x256xf32>,
    %c0_9 = arith.constant 0 : index
    %c0_10 = arith.constant 0 : index
    %9 = vector.load %arg3[%c0_9, %c0_10] : memref<64x256xf32, #tpu.memory_space<vmem>>, vector<64x256xf32>
    %cst_11 = arith.constant 0.000000e+00 : f32
    %10 = vector.broadcast %cst_11 : f32 to vector<8x64xf32>
    %cst_12 = arith.constant 0.000000e+00 : f32
    %11 = vector.broadcast %cst_12 : f32 to vector<8x64xf32>
    %c0_i32 = arith.constant 0 : i32
    %12 = arith.index_cast %c0_i32 : i32 to index
    %c0_13 = arith.constant 0 : index
    %c0_14 = arith.constant 0 : index
    %13 = vector.load %arg10[%12, %c0_13, %c0_14] : memref<8x8x256xf32, #tpu.memory_space<vmem>>, vector<1x8x256xf32>
    %14 = vector.shape_cast %13 : vector<1x8x256xf32> to vector<8x256xf32>
    %cst_15 = arith.constant dense<0.000000e+00> : vector<8x256xf32>
    %15 = tpu.matmul %10, %9, %cst_15 {dimension_numbers = #tpu.dot_dimension_numbers<[1], [0], [0], [1], [0, 0, 1, 1], [], []>} : vector<8x64xf32>, vector<64x256xf32>, vector<8x256xf32> -> vector<8x256xf32>
    %16 = arith.addf %14, %15 : vector<8x256xf32>
    %17 = vector.extract_strided_slice %16 {offsets = [0, 0], sizes = [8, 192], strides = [1, 1]} : vector<8x256xf32> to vector<8x192xf32>
    %18 = arith.negf %17 : vector<8x192xf32>
    %19 = math.exp %18 : vector<8x192xf32>
    %cst_16 = arith.constant 1.000000e+00 : f32
    %20 = vector.broadcast %cst_16 : f32 to vector<8x192xf32>
    %21 = arith.addf %20, %19 : vector<8x192xf32>
    %22 = arith.divf %20, %21 : vector<8x192xf32>
    %23 = vector.extract_strided_slice %22 {offsets = [0, 0], sizes = [8, 64], strides = [1, 1]} : vector<8x192xf32> to vector<8x64xf32>
    %24 = vector.extract_strided_slice %22 {offsets = [0, 64], sizes = [8, 64], strides = [1, 1]} : vector<8x192xf32> to vector<8x64xf32>
    %25 = vector.extract_strided_slice %22 {offsets = [0, 128], sizes = [8, 64], strides = [1, 1]} : vector<8x192xf32> to vector<8x64xf32>
    %26 = vector.extract_strided_slice %16 {offsets = [0, 192], sizes = [8, 64], strides = [1, 1]} : vector<8x256xf32> to vector<8x64xf32>
    %27 = math.tanh %26 : vector<8x64xf32>
    %28 = arith.mulf %24, %11 : vector<8x64xf32>
    %29 = arith.mulf %23, %27 : vector<8x64xf32>
    %30 = arith.addf %28, %29 : vector<8x64xf32>
    %31 = math.tanh %30 : vector<8x64xf32>
    %32 = arith.mulf %25, %31 : vector<8x64xf32>
    %c1_i32 = arith.constant 1 : i32
    %33 = arith.index_cast %c1_i32 : i32 to index
    %c0_17 = arith.constant 0 : index
    %c0_18 = arith.constant 0 : index
    %34 = vector.load %arg10[%33, %c0_17, %c0_18] : memref<8x8x256xf32, #tpu.memory_space<vmem>>, vector<1x8x256xf32>
    %35 = vector.shape_cast %34 : vector<1x8x256xf32> to vector<8x256xf32>
    %cst_19 = arith.constant dense<0.000000e+00> : vector<8x256xf32>
    %36 = tpu.matmul %32, %9, %cst_19 {dimension_numbers = #tpu.dot_dimension_numbers<[1], [0], [0], [1], [0, 0, 1, 1], [], []>} : vector<8x64xf32>, vector<64x256xf32>, vector<8x256xf32> -> vector<8x256xf32>
    %37 = arith.addf %35, %36 : vector<8x256xf32>
    %38 = vector.extract_strided_slice %37 {offsets = [0, 0], sizes = [8, 192], strides = [1, 1]} : vector<8x256xf32> to vector<8x192xf32>
    %39 = arith.negf %38 : vector<8x192xf32>
    %40 = math.exp %39 : vector<8x192xf32>
    %cst_20 = arith.constant 1.000000e+00 : f32
    %41 = vector.broadcast %cst_20 : f32 to vector<8x192xf32>
    %42 = arith.addf %41, %40 : vector<8x192xf32>
    %43 = arith.divf %41, %42 : vector<8x192xf32>
    %44 = vector.extract_strided_slice %43 {offsets = [0, 0], sizes = [8, 64], strides = [1, 1]} : vector<8x192xf32> to vector<8x64xf32>
    %45 = vector.extract_strided_slice %43 {offsets = [0, 64], sizes = [8, 64], strides = [1, 1]} : vector<8x192xf32> to vector<8x64xf32>
    %46 = vector.extract_strided_slice %43 {offsets = [0, 128], sizes = [8, 64], strides = [1, 1]} : vector<8x192xf32> to vector<8x64xf32>
    %47 = vector.extract_strided_slice %37 {offsets = [0, 192], sizes = [8, 64], strides = [1, 1]} : vector<8x256xf32> to vector<8x64xf32>
    %48 = math.tanh %47 : vector<8x64xf32>
    %49 = arith.mulf %45, %30 : vector<8x64xf32>
    %50 = arith.mulf %44, %48 : vector<8x64xf32>
    %51 = arith.addf %49, %50 : vector<8x64xf32>
    %52 = math.tanh %51 : vector<8x64xf32>
    %53 = arith.mulf %46, %52 : vector<8x64xf32>
    %c2_i32 = arith.constant 2 : i32
    %54 = arith.index_cast %c2_i32 : i32 to index
    %c0_21 = arith.constant 0 : index
    %c0_22 = arith.constant 0 : index
    %55 = vector.load %arg10[%54, %c0_21, %c0_22] : memref<8x8x256xf32, #tpu.memory_space<vmem>>, vector<1x8x256xf32>
    %56 = vector.shape_cast %55 : vector<1x8x256xf32> to vector<8x256xf32>
    %cst_23 = arith.constant dense<0.000000e+00> : vector<8x256xf32>
    %57 = tpu.matmul %53, %9, %cst_23 {dimension_numbers = #tpu.dot_dimension_numbers<[1], [0], [0], [1], [0, 0, 1, 1], [], []>} : vector<8x64xf32>, vector<64x256xf32>, vector<8x256xf32> -> vector<8x256xf32>
    %58 = arith.addf %56, %57 : vector<8x256xf32>
    %59 = vector.extract_strided_slice %58 {offsets = [0, 0], sizes = [8, 192], strides = [1, 1]} : vector<8x256xf32> to vector<8x192xf32>
    %60 = arith.negf %59 : vector<8x192xf32>
    %61 = math.exp %60 : vector<8x192xf32>
    %cst_24 = arith.constant 1.000000e+00 : f32
    %62 = vector.broadcast %cst_24 : f32 to vector<8x192xf32>
    %63 = arith.addf %62, %61 : vector<8x192xf32>
    %64 = arith.divf %62, %63 : vector<8x192xf32>
    %65 = vector.extract_strided_slice %64 {offsets = [0, 0], sizes = [8, 64], strides = [1, 1]} : vector<8x192xf32> to vector<8x64xf32>
    %66 = vector.extract_strided_slice %64 {offsets = [0, 64], sizes = [8, 64], strides = [1, 1]} : vector<8x192xf32> to vector<8x64xf32>
    %67 = vector.extract_strided_slice %64 {offsets = [0, 128], sizes = [8, 64], strides = [1, 1]} : vector<8x192xf32> to vector<8x64xf32>
    %68 = vector.extract_strided_slice %58 {offsets = [0, 192], sizes = [8, 64], strides = [1, 1]} : vector<8x256xf32> to vector<8x64xf32>
    %69 = math.tanh %68 : vector<8x64xf32>
    %70 = arith.mulf %66, %51 : vector<8x64xf32>
    %71 = arith.mulf %65, %69 : vector<8x64xf32>
    %72 = arith.addf %70, %71 : vector<8x64xf32>
    %73 = math.tanh %72 : vector<8x64xf32>
    %74 = arith.mulf %67, %73 : vector<8x64xf32>
    %c3_i32 = arith.constant 3 : i32
    %75 = arith.index_cast %c3_i32 : i32 to index
    %c0_25 = arith.constant 0 : index
    %c0_26 = arith.constant 0 : index
    %76 = vector.load %arg10[%75, %c0_25, %c0_26] : memref<8x8x256xf32, #tpu.memory_space<vmem>>, vector<1x8x256xf32>
    %77 = vector.shape_cast %76 : vector<1x8x256xf32> to vector<8x256xf32>
    %cst_27 = arith.constant dense<0.000000e+00> : vector<8x256xf32>
    %78 = tpu.matmul %74, %9, %cst_27 {dimension_numbers = #tpu.dot_dimension_numbers<[1], [0], [0], [1], [0, 0, 1, 1], [], []>} : vector<8x64xf32>, vector<64x256xf32>, vector<8x256xf32> -> vector<8x256xf32>
    %79 = arith.addf %77, %78 : vector<8x256xf32>
    %80 = vector.extract_strided_slice %79 {offsets = [0, 0], sizes = [8, 192], strides = [1, 1]} : vector<8x256xf32> to vector<8x192xf32>
    %81 = arith.negf %80 : vector<8x192xf32>
    %82 = math.exp %81 : vector<8x192xf32>
    %cst_28 = arith.constant 1.000000e+00 : f32
    %83 = vector.broadcast %cst_28 : f32 to vector<8x192xf32>
    %84 = arith.addf %83, %82 : vector<8x192xf32>
    %85 = arith.divf %83, %84 : vector<8x192xf32>
    %86 = vector.extract_strided_slice %85 {offsets = [0, 0], sizes = [8, 64], strides = [1, 1]} : vector<8x192xf32> to vector<8x64xf32>
    %87 = vector.extract_strided_slice %85 {offsets = [0, 64], sizes = [8, 64], strides = [1, 1]} : vector<8x192xf32> to vector<8x64xf32>
    %88 = vector.extract_strided_slice %85 {offsets = [0, 128], sizes = [8, 64], strides = [1, 1]} : vector<8x192xf32> to vector<8x64xf32>
    %89 = vector.extract_strided_slice %79 {offsets = [0, 192], sizes = [8, 64], strides = [1, 1]} : vector<8x256xf32> to vector<8x64xf32>
    %90 = math.tanh %89 : vector<8x64xf32>
    %91 = arith.mulf %87, %72 : vector<8x64xf32>
    %92 = arith.mulf %86, %90 : vector<8x64xf32>
    %93 = arith.addf %91, %92 : vector<8x64xf32>
    %94 = math.tanh %93 : vector<8x64xf32>
    %95 = arith.mulf %88, %94 : vector<8x64xf32>
    %c4_i32 = arith.constant 4 : i32
    %96 = arith.index_cast %c4_i32 : i32 to index
    %c0_29 = arith.constant 0 : index
    %c0_30 = arith.constant 0 : index
    %97 = vector.load %arg10[%96, %c0_29, %c0_30] : memref<8x8x256xf32, #tpu.memory_space<vmem>>, vector<1x8x256xf32>
    %98 = vector.shape_cast %97 : vector<1x8x256xf32> to vector<8x256xf32>
    %cst_31 = arith.constant dense<0.000000e+00> : vector<8x256xf32>
    %99 = tpu.matmul %95, %9, %cst_31 {dimension_numbers = #tpu.dot_dimension_numbers<[1], [0], [0], [1], [0, 0, 1, 1], [], []>} : vector<8x64xf32>, vector<64x256xf32>, vector<8x256xf32> -> vector<8x256xf32>
    %100 = arith.addf %98, %99 : vector<8x256xf32>
    %101 = vector.extract_strided_slice %100 {offsets = [0, 0], sizes = [8, 192], strides = [1, 1]} : vector<8x256xf32> to vector<8x192xf32>
    %102 = arith.negf %101 : vector<8x192xf32>
    %103 = math.exp %102 : vector<8x192xf32>
    %cst_32 = arith.constant 1.000000e+00 : f32
    %104 = vector.broadcast %cst_32 : f32 to vector<8x192xf32>
    %105 = arith.addf %104, %103 : vector<8x192xf32>
    %106 = arith.divf %104, %105 : vector<8x192xf32>
    %107 = vector.extract_strided_slice %106 {offsets = [0, 0], sizes = [8, 64], strides = [1, 1]} : vector<8x192xf32> to vector<8x64xf32>
    %108 = vector.extract_strided_slice %106 {offsets = [0, 64], sizes = [8, 64], strides = [1, 1]} : vector<8x192xf32> to vector<8x64xf32>
    %109 = vector.extract_strided_slice %106 {offsets = [0, 128], sizes = [8, 64], strides = [1, 1]} : vector<8x192xf32> to vector<8x64xf32>
    %110 = vector.extract_strided_slice %100 {offsets = [0, 192], sizes = [8, 64], strides = [1, 1]} : vector<8x256xf32> to vector<8x64xf32>
    %111 = math.tanh %110 : vector<8x64xf32>
    %112 = arith.mulf %108, %93 : vector<8x64xf32>
    %113 = arith.mulf %107, %111 : vector<8x64xf32>
    %114 = arith.addf %112, %113 : vector<8x64xf32>
    %115 = math.tanh %114 : vector<8x64xf32>
    %116 = arith.mulf %109, %115 : vector<8x64xf32>
    %c5_i32 = arith.constant 5 : i32
    %117 = arith.index_cast %c5_i32 : i32 to index
    %c0_33 = arith.constant 0 : index
    %c0_34 = arith.constant 0 : index
    %118 = vector.load %arg10[%117, %c0_33, %c0_34] : memref<8x8x256xf32, #tpu.memory_space<vmem>>, vector<1x8x256xf32>
    %119 = vector.shape_cast %118 : vector<1x8x256xf32> to vector<8x256xf32>
    %cst_35 = arith.constant dense<0.000000e+00> : vector<8x256xf32>
    %120 = tpu.matmul %116, %9, %cst_35 {dimension_numbers = #tpu.dot_dimension_numbers<[1], [0], [0], [1], [0, 0, 1, 1], [], []>} : vector<8x64xf32>, vector<64x256xf32>, vector<8x256xf32> -> vector<8x256xf32>
    %121 = arith.addf %119, %120 : vector<8x256xf32>
    %122 = vector.extract_strided_slice %121 {offsets = [0, 0], sizes = [8, 192], strides = [1, 1]} : vector<8x256xf32> to vector<8x192xf32>
    %123 = arith.negf %122 : vector<8x192xf32>
    %124 = math.exp %123 : vector<8x192xf32>
    %cst_36 = arith.constant 1.000000e+00 : f32
    %125 = vector.broadcast %cst_36 : f32 to vector<8x192xf32>
    %126 = arith.addf %125, %124 : vector<8x192xf32>
    %127 = arith.divf %125, %126 : vector<8x192xf32>
    %128 = vector.extract_strided_slice %127 {offsets = [0, 0], sizes = [8, 64], strides = [1, 1]} : vector<8x192xf32> to vector<8x64xf32>
    %129 = vector.extract_strided_slice %127 {offsets = [0, 64], sizes = [8, 64], strides = [1, 1]} : vector<8x192xf32> to vector<8x64xf32>
    %130 = vector.extract_strided_slice %127 {offsets = [0, 128], sizes = [8, 64], strides = [1, 1]} : vector<8x192xf32> to vector<8x64xf32>
    %131 = vector.extract_strided_slice %121 {offsets = [0, 192], sizes = [8, 64], strides = [1, 1]} : vector<8x256xf32> to vector<8x64xf32>
    %132 = math.tanh %131 : vector<8x64xf32>
    %133 = arith.mulf %129, %114 : vector<8x64xf32>
    %134 = arith.mulf %128, %132 : vector<8x64xf32>
    %135 = arith.addf %133, %134 : vector<8x64xf32>
    %136 = math.tanh %135 : vector<8x64xf32>
    %137 = arith.mulf %130, %136 : vector<8x64xf32>
    %c6_i32 = arith.constant 6 : i32
    %138 = arith.index_cast %c6_i32 : i32 to index
    %c0_37 = arith.constant 0 : index
    %c0_38 = arith.constant 0 : index
    %139 = vector.load %arg10[%138, %c0_37, %c0_38] : memref<8x8x256xf32, #tpu.memory_space<vmem>>, vector<1x8x256xf32>
    %140 = vector.shape_cast %139 : vector<1x8x256xf32> to vector<8x256xf32>
    %cst_39 = arith.constant dense<0.000000e+00> : vector<8x256xf32>
    %141 = tpu.matmul %137, %9, %cst_39 {dimension_numbers = #tpu.dot_dimension_numbers<[1], [0], [0], [1], [0, 0, 1, 1], [], []>} : vector<8x64xf32>, vector<64x256xf32>, vector<8x256xf32> -> vector<8x256xf32>
    %142 = arith.addf %140, %141 : vector<8x256xf32>
    %143 = vector.extract_strided_slice %142 {offsets = [0, 0], sizes = [8, 192], strides = [1, 1]} : vector<8x256xf32> to vector<8x192xf32>
    %144 = arith.negf %143 : vector<8x192xf32>
    %145 = math.exp %144 : vector<8x192xf32>
    %cst_40 = arith.constant 1.000000e+00 : f32
    %146 = vector.broadcast %cst_40 : f32 to vector<8x192xf32>
    %147 = arith.addf %146, %145 : vector<8x192xf32>
    %148 = arith.divf %146, %147 : vector<8x192xf32>
    %149 = vector.extract_strided_slice %148 {offsets = [0, 0], sizes = [8, 64], strides = [1, 1]} : vector<8x192xf32> to vector<8x64xf32>
    %150 = vector.extract_strided_slice %148 {offsets = [0, 64], sizes = [8, 64], strides = [1, 1]} : vector<8x192xf32> to vector<8x64xf32>
    %151 = vector.extract_strided_slice %148 {offsets = [0, 128], sizes = [8, 64], strides = [1, 1]} : vector<8x192xf32> to vector<8x64xf32>
    %152 = vector.extract_strided_slice %142 {offsets = [0, 192], sizes = [8, 64], strides = [1, 1]} : vector<8x256xf32> to vector<8x64xf32>
    %153 = math.tanh %152 : vector<8x64xf32>
    %154 = arith.mulf %150, %135 : vector<8x64xf32>
    %155 = arith.mulf %149, %153 : vector<8x64xf32>
    %156 = arith.addf %154, %155 : vector<8x64xf32>
    %157 = math.tanh %156 : vector<8x64xf32>
    %158 = arith.mulf %151, %157 : vector<8x64xf32>
    %c7_i32 = arith.constant 7 : i32
    %159 = arith.index_cast %c7_i32 : i32 to index
    %c0_41 = arith.constant 0 : index
    %c0_42 = arith.constant 0 : index
    %160 = vector.load %arg10[%159, %c0_41, %c0_42] : memref<8x8x256xf32, #tpu.memory_space<vmem>>, vector<1x8x256xf32>
    %161 = vector.shape_cast %160 : vector<1x8x256xf32> to vector<8x256xf32>
    %cst_43 = arith.constant dense<0.000000e+00> : vector<8x256xf32>
    %162 = tpu.matmul %158, %9, %cst_43 {dimension_numbers = #tpu.dot_dimension_numbers<[1], [0], [0], [1], [0, 0, 1, 1], [], []>} : vector<8x64xf32>, vector<64x256xf32>, vector<8x256xf32> -> vector<8x256xf32>
    %163 = arith.addf %161, %162 : vector<8x256xf32>
    %164 = vector.extract_strided_slice %163 {offsets = [0, 0], sizes = [8, 192], strides = [1, 1]} : vector<8x256xf32> to vector<8x192xf32>
    %165 = arith.negf %164 : vector<8x192xf32>
    %166 = math.exp %165 : vector<8x192xf32>
    %cst_44 = arith.constant 1.000000e+00 : f32
    %167 = vector.broadcast %cst_44 : f32 to vector<8x192xf32>
    %168 = arith.addf %167, %166 : vector<8x192xf32>
    %169 = arith.divf %167, %168 : vector<8x192xf32>
    %170 = vector.extract_strided_slice %169 {offsets = [0, 0], sizes = [8, 64], strides = [1, 1]} : vector<8x192xf32> to vector<8x64xf32>
    %171 = vector.extract_strided_slice %169 {offsets = [0, 64], sizes = [8, 64], strides = [1, 1]} : vector<8x192xf32> to vector<8x64xf32>
    %172 = vector.extract_strided_slice %169 {offsets = [0, 128], sizes = [8, 64], strides = [1, 1]} : vector<8x192xf32> to vector<8x64xf32>
    %173 = vector.extract_strided_slice %163 {offsets = [0, 192], sizes = [8, 64], strides = [1, 1]} : vector<8x256xf32> to vector<8x64xf32>
    %174 = math.tanh %173 : vector<8x64xf32>
    %175 = arith.mulf %171, %156 : vector<8x64xf32>
    %176 = arith.mulf %170, %174 : vector<8x64xf32>
    %177 = arith.addf %175, %176 : vector<8x64xf32>
    %178 = math.tanh %177 : vector<8x64xf32>
    %179 = arith.mulf %172, %178 : vector<8x64xf32>
    %c8_i32 = arith.constant 8 : i32
    %c0_45 = arith.constant 0 : index
    %c0_46 = arith.constant 0 : index
    %180 = vector.load %arg5[%c0_45, %c0_46] : memref<64x32xf32, #tpu.memory_space<vmem>>, vector<64x32xf32>
    %cst_47 = arith.constant dense<0.000000e+00> : vector<8x32xf32>
    %181 = tpu.matmul %179, %180, %cst_47 {dimension_numbers = #tpu.dot_dimension_numbers<[1], [0], [0], [1], [0, 0, 1, 1], [], []>} : vector<8x64xf32>, vector<64x32xf32>, vector<8x32xf32> -> vector<8x32xf32>
    %c0_48 = arith.constant 0 : index
    %c0_49 = arith.constant 0 : index
    %182 = vector.load %arg6[%c0_48, %c0_49] : memref<1x32xf32, #tpu.memory_space<vmem>>, vector<1x32xf32>
    %183 = vector.broadcast %182 : vector<1x32xf32> to vector<8x32xf32>
    %184 = arith.addf %181, %183 : vector<8x32xf32>
    %cst_50 = arith.constant 0.000000e+00 : f32
    %185 = vector.broadcast %cst_50 : f32 to vector<8x32xf32>
    %186 = arith.maximumf %184, %185 : vector<8x32xf32>
    %c0_51 = arith.constant 0 : index
    %c0_52 = arith.constant 0 : index
    %187 = vector.load %arg7[%c0_51, %c0_52] : memref<32x128xf32, #tpu.memory_space<vmem>>, vector<32x128xf32>
    %cst_53 = arith.constant dense<0.000000e+00> : vector<8x128xf32>
    %188 = tpu.matmul %186, %187, %cst_53 {dimension_numbers = #tpu.dot_dimension_numbers<[1], [0], [0], [1], [0, 0, 1, 1], [], []>} : vector<8x32xf32>, vector<32x128xf32>, vector<8x128xf32> -> vector<8x128xf32>
    %c0_54 = arith.constant 0 : index
    %c0_55 = arith.constant 0 : index
    %189 = vector.load %arg8[%c0_54, %c0_55] : memref<1x128xf32, #tpu.memory_space<vmem>>, vector<1x128xf32>
    %190 = vector.broadcast %189 : vector<1x128xf32> to vector<8x128xf32>
    %191 = arith.addf %188, %190 : vector<8x128xf32>
    %192 = arith.negf %191 : vector<8x128xf32>
    %193 = math.exp %192 : vector<8x128xf32>
    %cst_56 = arith.constant 1.000000e+00 : f32
    %194 = vector.broadcast %cst_56 : f32 to vector<8x128xf32>
    %195 = arith.addf %194, %193 : vector<8x128xf32>
    %196 = arith.divf %194, %195 : vector<8x128xf32>
    %c0_57 = arith.constant 0 : index
    %c0_58 = arith.constant 0 : index
    %197 = vector.load %arg9[%c0_57, %c0_58] : memref<8x128xf32, #tpu.memory_space<vmem>>, vector<8x128xf32>
    tpu.vector_store %arg9[%c0_57, %c0_58], %196 {strides = array<i32>} : memref<8x128xf32, #tpu.memory_space<vmem>>, vector<8x128xf32>,
    return
  }
  func.func @transform_0(%arg0: i32) -> (i32, i32, i32) {
    %c0_i32 = arith.constant 0 : i32
    %c0_i32_0 = arith.constant 0 : i32
    %c0_i32_1 = arith.constant 0 : i32
    return %c0_i32, %arg0, %c0_i32_0 : i32, i32, i32
  }
  func.func @transform_1(%arg0: i32) -> (i32, i32) {
    %c0_i32 = arith.constant 0 : i32
    %c0_i32_0 = arith.constant 0 : i32
    %c0_i32_1 = arith.constant 0 : i32
    return %c0_i32, %c0_i32_0 : i32, i32
  }
  func.func @transform_2(%arg0: i32) -> (i32, i32) {
    %c0_i32 = arith.constant 0 : i32
    %c0_i32_0 = arith.constant 0 : i32
    %c0_i32_1 = arith.constant 0 : i32
    return %c0_i32, %c0_i32_0 : i32, i32
  }
  func.func @transform_3(%arg0: i32) -> (i32, i32) {
    %c0_i32 = arith.constant 0 : i32
    %c0_i32_0 = arith.constant 0 : i32
    %c0_i32_1 = arith.constant 0 : i32
    return %c0_i32, %c0_i32_0 : i32, i32
  }
  func.func @transform_4(%arg0: i32) -> (i32, i32) {
    %c0_i32 = arith.constant 0 : i32
    %c0_i32_0 = arith.constant 0 : i32
    %c0_i32_1 = arith.constant 0 : i32
    return %c0_i32, %c0_i32_0 : i32, i32
  }
  func.func @transform_5(%arg0: i32) -> (i32, i32) {
    %c0_i32 = arith.constant 0 : i32
    %c0_i32_0 = arith.constant 0 : i32
    %c0_i32_1 = arith.constant 0 : i32
    return %c0_i32, %c0_i32_0 : i32, i32
  }
  func.func @transform_6(%arg0: i32) -> (i32, i32) {
    %c0_i32 = arith.constant 0 : i32
    %c0_i32_0 = arith.constant 0 : i32
    %c0_i32_1 = arith.constant 0 : i32
    return %c0_i32, %c0_i32_0 : i32, i32
  }
  func.func @transform_7(%arg0: i32) -> (i32, i32) {
    %c0_i32 = arith.constant 0 : i32
    %c0_i32_0 = arith.constant 0 : i32
    %c0_i32_1 = arith.constant 0 : i32
    return %c0_i32, %c0_i32_0 : i32, i32
  }
  func.func @transform_8(%arg0: i32) -> (i32, i32) {
    %c0_i32 = arith.constant 0 : i32
    %c0_i32_0 = arith.constant 0 : i32
    return %arg0, %c0_i32 : i32, i32
  }
}

</mosaic_0001>

<llo_original>
// kernel: tpu_custom_call.1
$region0: #{tpu_custom_call.1}
  #allocation0 [shape = 'u32[]', space=smem, size = 0x4, offset = 0x4, fixed_abs, tag = 'smem constant byte address 0x4 - core index']
  #allocation1 [shape = 'u32[144,128]{1,0:T(1,128)}', space=vmem, size = 0x12000, scoped, tag = 'internal scratch']
  #allocation2 [shape = 'f32[8,8,256]{2,1,0:T(8,128)}', space=vmem, size = 0x10000, scoped, tag = 'scratch operand']
  %s0 = inlined_call_operand.vmem [shape: bf16[8,8,128], index: 0, kind: input, shape index: {}]
  %s1 = inlined_call_operand.hbm [shape: bf16[128,256], index: 1, kind: input, shape index: {}]
  %s2 = inlined_call_operand.hbm [shape: f32[64,256], index: 2, kind: input, shape index: {}]
  %s3 = inlined_call_operand.vmem [shape: f32[1,256], index: 3, kind: input, shape index: {}]
  %s4 = inlined_call_operand.vmem [shape: f32[64,32], index: 4, kind: input, shape index: {}]
  %s5 = inlined_call_operand.vmem [shape: f32[1,32], index: 5, kind: input, shape index: {}]
  %s6 = inlined_call_operand.vmem [shape: f32[32,128], index: 6, kind: input, shape index: {}]
  %s7 = inlined_call_operand.vmem [shape: f32[1,128], index: 7, kind: input, shape index: {}]
  %s8 = inlined_call_operand.hbm [shape: f32[8,128], index: 8, kind: output, shape index: {}]
  %s9 = sld [smem:[#allocation0]]
  $region50: #{tpu_custom_call.1} parent=0
    _
  %s11 = ssub.s32 1, %s9
  %s12 = scalar_select 0, %s11, %s9
  $region1: #{tpu_custom_call.1} parent=0
    #allocation3 [shape = 'u8[65536]{0}', space=vmem, size = 0x10000, scoped, tag = 'input window, operand 1, single buffered']
    #allocation4 [shape = 's32[1]{0}', space=sflag, size = 0x4, scoped, tag = 'scoped memory for tpu_custom_call.1']
    #allocation5 [shape = 's32[1]{0}', space=sflag, size = 0x4, scoped, tag = 'scoped memory for tpu_custom_call.1']
    #allocation6 [shape = 'u8[65536]{0}', space=vmem, size = 0x10000, scoped, tag = 'input window, operand 2, single buffered']
    #allocation7 [shape = 's32[1]{0}', space=sflag, size = 0x4, scoped, tag = 'scoped memory for tpu_custom_call.1']
    #allocation8 [shape = 'u8[4096]{0}', space=vmem, size = 0x1000, scoped, tag = 'output window, operand 0, single buffered']
    %13 = vsyncpa [#allocation4], 0
    %14 = vsyncpa [#allocation7], 0
    %15 = vsyncpa [#allocation5], 0
    // Predicated region
    $region2: #{tpu_custom_call.1} parent=1 // pred_check
      _
    $region3: #{tpu_custom_call.1} parent=1 // pred_check_branch
      %17 = sbr.rel (0) target = $region5
    $region4: #{tpu_custom_call.1} parent=1 // pred_region
      _
    $region5: #{tpu_custom_call.1} parent=1 // pred_fallthru
      _
    // Predicated region
    $region6: #{tpu_custom_call.1} parent=1 // pred_check
      _
    $region7: #{tpu_custom_call.1} parent=1 // pred_check_branch
      %19 = sbr.rel (0) target = $region9
    $region8: #{tpu_custom_call.1} parent=1 // pred_region
      %s21 = ssub.s32 2048, 2048
      %22 = vsyncadd [#allocation4], %s21
      %s23 = sshll.u32 [#allocation3], 4
      %s24 = int_to_ptr.vmem [resolvable:$true] %s23
      %29 = dma.hbm_to_vmem [thread:$0]  %s1, 2048, %s24, [#allocation4], 128, 128, 8
    $region9: #{tpu_custom_call.1} parent=1 // pred_fallthru
      _
    // Predicated region
    $region10: #{tpu_custom_call.1} parent=1 // pred_check
      _
    $region11: #{tpu_custom_call.1} parent=1 // pred_check_branch
      %31 = sbr.rel (0) target = $region13
    $region12: #{tpu_custom_call.1} parent=1 // pred_region
      %s33 = ssub.s32 2048, 2048
      %34 = vsyncadd [#allocation7], %s33
      %s35 = sshll.u32 [#allocation6], 4
      %s36 = int_to_ptr.vmem [resolvable:$true] %s35
      %41 = dma.hbm_to_vmem [thread:$0]  %s2, 2048, %s36, [#allocation7], 256, 256, 16
    $region13: #{tpu_custom_call.1} parent=1 // pred_fallthru
      _
    // Predicated region
    $region14: #{tpu_custom_call.1} parent=1 // pred_check
      _
    $region15: #{tpu_custom_call.1} parent=1 // pred_check_branch
      %43 = sbr.rel (0) target = $region17
    $region16: #{tpu_custom_call.1} parent=1 // pred_region
      _
    $region17: #{tpu_custom_call.1} parent=1 // pred_fallthru
      _
    // Predicated region
    $region18: #{tpu_custom_call.1} parent=1 // pred_check
      _
    $region19: #{tpu_custom_call.1} parent=1 // pred_check_branch
      %45 = sbr.rel (0) target = $region21
    $region20: #{tpu_custom_call.1} parent=1 // pred_region
      _
    $region21: #{tpu_custom_call.1} parent=1 // pred_fallthru
      _
    // Predicated region
    $region22: #{tpu_custom_call.1} parent=1 // pred_check
      _
    $region23: #{tpu_custom_call.1} parent=1 // pred_check_branch
      %47 = sbr.rel (0) target = $region25
    $region24: #{tpu_custom_call.1} parent=1 // pred_region
      _
    $region25: #{tpu_custom_call.1} parent=1 // pred_fallthru
      _
    // Predicated region
    $region26: #{tpu_custom_call.1} parent=1 // pred_check
      _
    $region27: #{tpu_custom_call.1} parent=1 // pred_check_branch
      %49 = sbr.rel (0) target = $region29
    $region28: #{tpu_custom_call.1} parent=1 // pred_region
      _
    $region29: #{tpu_custom_call.1} parent=1 // pred_fallthru
      _
    // Predicated region
    $region30: #{tpu_custom_call.1} parent=1 // pred_check
      _
    $region31: #{tpu_custom_call.1} parent=1 // pred_check_branch
      %51 = sbr.rel (0) target = $region33
    $region32: #{tpu_custom_call.1} parent=1 // pred_region
      _
    $region33: #{tpu_custom_call.1} parent=1 // pred_fallthru
      _
    // Predicated region
    $region34: #{tpu_custom_call.1} parent=1 // pred_check
      _
    $region35: #{tpu_custom_call.1} parent=1 // pred_check_branch
      %53 = sbr.rel (0) target = $region37
    $region36: #{tpu_custom_call.1} parent=1 // pred_region
      %54 = dma.done [#allocation4], 2048
    $region37: #{tpu_custom_call.1} parent=1 // pred_fallthru
      _
    // Predicated region
    $region38: #{tpu_custom_call.1} parent=1 // pred_check
      _
    $region39: #{tpu_custom_call.1} parent=1 // pred_check_branch
      %56 = sbr.rel (0) target = $region41
    $region40: #{tpu_custom_call.1} parent=1 // pred_region
      %57 = dma.done [#allocation7], 2048
    $region41: #{tpu_custom_call.1} parent=1 // pred_fallthru
      _
    %v59 = vld [vmem:[%s0] sm:$0xf]
    %v60 = vld [vmem:[%s0 + $0x4] sm:$0xf]
    %v61 = vld [vmem:[%s0 + $0x8] sm:$0xf]
    %v62 = vld [vmem:[%s0 + $0xc] sm:$0xf]
    %v63 = vld [vmem:[%s0 + $0x10] sm:$0xf]
    %v64 = vld [vmem:[%s0 + $0x14] sm:$0xf]
    %v65 = vld [vmem:[%s0 + $0x18] sm:$0xf]
    %v66 = vld [vmem:[%s0 + $0x1c] sm:$0xf]
    %v67 = vld [vmem:[#allocation3] sm:$0xff]
    %v68 = vld [vmem:[#allocation3 + $0x8] sm:$0xff]
    %v69 = vld [vmem:[#allocation3 + $0x10] sm:$0xff]
    %v70 = vld [vmem:[#allocation3 + $0x18] sm:$0xff]
    %v71 = vld [vmem:[#allocation3 + $0x20] sm:$0xff]
    %v72 = vld [vmem:[#allocation3 + $0x28] sm:$0xff]
    %v73 = vld [vmem:[#allocation3 + $0x30] sm:$0xff]
    %v74 = vld [vmem:[#allocation3 + $0x38] sm:$0xff]
    %v75 = vld [vmem:[#allocation3 + $0x40] sm:$0xff]
    %v76 = vld [vmem:[#allocation3 + $0x48] sm:$0xff]
    %v77 = vld [vmem:[#allocation3 + $0x50] sm:$0xff]
    %v78 = vld [vmem:[#allocation3 + $0x58] sm:$0xff]
    %v79 = vld [vmem:[#allocation3 + $0x60] sm:$0xff]
    %v80 = vld [vmem:[#allocation3 + $0x68] sm:$0xff]
    %v81 = vld [vmem:[#allocation3 + $0x70] sm:$0xff]
    %v82 = vld [vmem:[#allocation3 + $0x78] sm:$0xff]
    %v83 = vld [vmem:[%s3] sm:$0x3]
    %v85 = vlaneseq
    %v86 = vshrl.u32 %v85, 7
    %v87 = vsub.s32 0, %v86
    %v88 = vrot.slane %v83, %v87
    %v89 = vlaneseq
    %v90 = vshrl.u32 %v89, 7
    %v91 = vsub.s32 1, %v90
    %v92 = vrot.slane %v83, %v91
    %v103 = vunpack.c.l.b16 %v59
    %v104 = vunpack.c.l.b16 %v60
    %v105 = vunpack.c.l.b16 %v61
    %v106 = vunpack.c.l.b16 %v62
    %v107 = vunpack.c.l.b16 %v63
    %v108 = vunpack.c.l.b16 %v64
    %v109 = vunpack.c.l.b16 %v65
    %v110 = vunpack.c.l.b16 %v66
    %v111 = vpack.c.b16 %v104, %v103
    %v112 = vpack.c.b16 %v106, %v105
    %v113 = vpack.c.b16 %v108, %v107
    %v114 = vpack.c.b16 %v110, %v109
    %v135 = vunpack.c.l.b16 %v67
    %v136 = vunpack.c.h.b16 %v67
    %v137 = vunpack.c.l.b16 %v68
    %v138 = vunpack.c.h.b16 %v68
    %v139 = vunpack.c.l.b16 %v69
    %v140 = vunpack.c.h.b16 %v69
    %v141 = vunpack.c.l.b16 %v70
    %v142 = vunpack.c.h.b16 %v70
    %v143 = vunpack.c.l.b16 %v71
    %v144 = vunpack.c.h.b16 %v71
    %v145 = vunpack.c.l.b16 %v72
    %v146 = vunpack.c.h.b16 %v72
    %v147 = vunpack.c.l.b16 %v73
    %v148 = vunpack.c.h.b16 %v73
    %v149 = vunpack.c.l.b16 %v74
    %v150 = vunpack.c.h.b16 %v74
    %v151 = vunpack.c.l.b16 %v75
    %v152 = vunpack.c.h.b16 %v75
    %v153 = vunpack.c.l.b16 %v76
    %v154 = vunpack.c.h.b16 %v76
    %v155 = vunpack.c.l.b16 %v77
    %v156 = vunpack.c.h.b16 %v77
    %v157 = vunpack.c.l.b16 %v78
    %v158 = vunpack.c.h.b16 %v78
    %v159 = vunpack.c.l.b16 %v79
    %v160 = vunpack.c.h.b16 %v79
    %v161 = vunpack.c.l.b16 %v80
    %v162 = vunpack.c.h.b16 %v80
    %v163 = vunpack.c.l.b16 %v81
    %v164 = vunpack.c.h.b16 %v81
    %v165 = vunpack.c.l.b16 %v82
    %v166 = vunpack.c.h.b16 %v82
    %v167 = vpack.c.b16 %v137, %v135
    %v168 = vpack.c.b16 %v138, %v136
    %v169 = vpack.c.b16 %v141, %v139
    %v170 = vpack.c.b16 %v142, %v140
    %v171 = vpack.c.b16 %v145, %v143
    %v172 = vpack.c.b16 %v146, %v144
    %v173 = vpack.c.b16 %v149, %v147
    %v174 = vpack.c.b16 %v150, %v148
    %v175 = vpack.c.b16 %v153, %v151
    %v176 = vpack.c.b16 %v154, %v152
    %v177 = vpack.c.b16 %v157, %v155
    %v178 = vpack.c.b16 %v158, %v156
    %v179 = vpack.c.b16 %v161, %v159
    %v180 = vpack.c.b16 %v162, %v160
    %v181 = vpack.c.b16 %v165, %v163
    %v182 = vpack.c.b16 %v166, %v164
    %199 = vmatprep.subr.bf16.mxu0 %v182
    %200 = vmatpush1.bf16.msra.mxu0 %v181
    %201 = vmatprep.subr.bf16.mxu0 %v180
    %202 = vmatpush1.bf16.msra.mxu0 %v179
    %203 = vmatprep.subr.bf16.mxu0 %v178
    %204 = vmatpush1.bf16.msra.mxu0 %v177
    %205 = vmatprep.subr.bf16.mxu0 %v176
    %206 = vmatpush1.bf16.msra.mxu0 %v175
    %207 = vmatprep.subr.bf16.mxu0 %v174
    %208 = vmatpush1.bf16.msra.mxu0 %v173
    %209 = vmatprep.subr.bf16.mxu0 %v172
    %210 = vmatpush1.bf16.msra.mxu0 %v171
    %211 = vmatprep.subr.bf16.mxu0 %v170
    %212 = vmatpush1.bf16.msra.mxu0 %v169
    %213 = vmatprep.subr.bf16.mxu0 %v168
    %214 = vmatpush1.bf16.msra.mxu0 %v167
    %215 = vmatprep.subr.bf16.mxu0 0
    %216 = vmatpush2.bf16.msra.mxu0 0
    %217 = vmatprep.subr.bf16.mxu0 0
    %218 = vmatpush2.bf16.msra.mxu0 0
    %219 = vmatprep.subr.bf16.mxu0 0
    %220 = vmatpush2.bf16.msra.mxu0 0
    %221 = vmatprep.subr.bf16.mxu0 0
    %222 = vmatpush2.bf16.msra.mxu0 0
    %223 = vmatprep.subr.bf16.mxu0 0
    %224 = vmatpush2.bf16.msra.mxu0 0
    %225 = vmatprep.subr.bf16.mxu0 0
    %226 = vmatpush2.bf16.msra.mxu0 0
    %227 = vmatprep.subr.bf16.mxu0 0
    %228 = vmatpush2.bf16.msra.mxu0 0
    %229 = vmatprep.subr.bf16.mxu0 0
    %230 = vmatpush2.bf16.msra.mxu0 0
    %231 = vmatprep.mubr.bf16.mxu0 0
    %232 = vmatmul.mubr.bf16.gmra.mxu0 %v111
    %v233 = vpop.f32.mrf.mxu0
    %v234 = vadd.f32 %v88, %v233
    %v235 = vpop.f32.mrf.mxu0
    %v236 = vadd.f32 %v92, %v235
    %v237 = vpop.f32.mrf.mxu0
    %v238 = vadd.f32 %v88, %v237
    %v239 = vpop.f32.mrf.mxu0
    %v240 = vadd.f32 %v92, %v239
    %241 = vmatprep.mubr.bf16.mxu0 0
    %242 = vmatmul.mubr.bf16.gmra.mxu0 %v112
    %v243 = vpop.f32.mrf.mxu0
    %v244 = vadd.f32 %v88, %v243
    %v245 = vpop.f32.mrf.mxu0
    %v246 = vadd.f32 %v92, %v245
    %v247 = vpop.f32.mrf.mxu0
    %v248 = vadd.f32 %v88, %v247
    %v249 = vpop.f32.mrf.mxu0
    %v250 = vadd.f32 %v92, %v249
    %251 = vmatprep.mubr.bf16.mxu0 0
    %252 = vmatmul.mubr.bf16.gmra.mxu0 %v113
    %v253 = vpop.f32.mrf.mxu0
    %v254 = vadd.f32 %v88, %v253
    %v255 = vpop.f32.mrf.mxu0
    %v256 = vadd.f32 %v92, %v255
    %v257 = vpop.f32.mrf.mxu0
    %v258 = vadd.f32 %v88, %v257
    %v259 = vpop.f32.mrf.mxu0
    %v260 = vadd.f32 %v92, %v259
    %261 = vmatprep.mubr.bf16.mxu0 0
    %262 = vmatmul.mubr.bf16.gmra.mxu0 %v114
    %v263 = vpop.f32.mrf.mxu0
    %v264 = vadd.f32 %v88, %v263
    %v265 = vpop.f32.mrf.mxu0
    %v266 = vadd.f32 %v92, %v265
    %v267 = vpop.f32.mrf.mxu0
    %v268 = vadd.f32 %v88, %v267
    %v269 = vpop.f32.mrf.mxu0
    %v270 = vadd.f32 %v92, %v269
    %271 = vdwg.mxu0
    %272 = vst [vmem:[#allocation2] sm:$0xff] %v234
    %273 = vst [vmem:[#allocation2 + $0x8] sm:$0xff] %v236
    %274 = vst [vmem:[#allocation2 + $0x10] sm:$0xff] %v238
    %275 = vst [vmem:[#allocation2 + $0x18] sm:$0xff] %v240
    %276 = vst [vmem:[#allocation2 + $0x20] sm:$0xff] %v244
    %277 = vst [vmem:[#allocation2 + $0x28] sm:$0xff] %v246
    %278 = vst [vmem:[#allocation2 + $0x30] sm:$0xff] %v248
    %279 = vst [vmem:[#allocation2 + $0x38] sm:$0xff] %v250
    %280 = vst [vmem:[#allocation2 + $0x40] sm:$0xff] %v254
    %281 = vst [vmem:[#allocation2 + $0x48] sm:$0xff] %v256
    %282 = vst [vmem:[#allocation2 + $0x50] sm:$0xff] %v258
    %283 = vst [vmem:[#allocation2 + $0x58] sm:$0xff] %v260
    %284 = vst [vmem:[#allocation2 + $0x60] sm:$0xff] %v264
    %285 = vst [vmem:[#allocation2 + $0x68] sm:$0xff] %v266
    %286 = vst [vmem:[#allocation2 + $0x70] sm:$0xff] %v268
    %287 = vst [vmem:[#allocation2 + $0x78] sm:$0xff] %v270
    %v288 = vld [vmem:[#allocation6] sm:$0xff]
    %v289 = vld [vmem:[#allocation6 + $0x8] sm:$0xff]
    %v290 = vld [vmem:[#allocation6 + $0x10] sm:$0xff]
    %v291 = vld [vmem:[#allocation6 + $0x18] sm:$0xff]
    %v292 = vld [vmem:[#allocation6 + $0x20] sm:$0xff]
    %v293 = vld [vmem:[#allocation6 + $0x28] sm:$0xff]
    %v294 = vld [vmem:[#allocation6 + $0x30] sm:$0xff]
    %v295 = vld [vmem:[#allocation6 + $0x38] sm:$0xff]
    %v296 = vld [vmem:[#allocation6 + $0x40] sm:$0xff]
    %v297 = vld [vmem:[#allocation6 + $0x48] sm:$0xff]
    %v298 = vld [vmem:[#allocation6 + $0x50] sm:$0xff]
    %v299 = vld [vmem:[#allocation6 + $0x58] sm:$0xff]
    %v300 = vld [vmem:[#allocation6 + $0x60] sm:$0xff]
    %v301 = vld [vmem:[#allocation6 + $0x68] sm:$0xff]
    %v302 = vld [vmem:[#allocation6 + $0x70] sm:$0xff]
    %v303 = vld [vmem:[#allocation6 + $0x78] sm:$0xff]
    %v304 = vld [vmem:[#allocation2] sm:$0xff]
    %v305 = vld [vmem:[#allocation2 + $0x8] sm:$0xff]
    %vm306 = vcmask 523264
    %v308 = vsel %vm306, 0.0, 0
    %310 = vmatprep.subr.mxu0 0.0
    %311 = vmatpush1.msra.mxu0 0.0
    %312 = vmatprep.subr.mxu0 0.0
    %313 = vmatpush1.msra.mxu0 0.0
    %314 = vmatprep.subr.mxu0 0.0
    %315 = vmatpush1.msra.mxu0 0.0
    %316 = vmatprep.subr.mxu0 0.0
    %317 = vmatpush1.msra.mxu0 0.0
    %318 = vmatprep.subr.mxu0 0.0
    %319 = vmatpush1.msra.mxu0 0.0
    %320 = vmatprep.subr.mxu0 0.0
    %321 = vmatpush1.msra.mxu0 0.0
    %322 = vmatprep.subr.mxu0 0.0
    %323 = vmatpush1.msra.mxu0 0.0
    %324 = vmatprep.subr.mxu0 0.0
    %325 = vmatpush1.msra.mxu0 0.0
    %326 = vmatprep.subr.mxu0 %v303
    %327 = vmatpush1.msra.mxu0 %v302
    %328 = vmatprep.subr.mxu0 %v301
    %329 = vmatpush1.msra.mxu0 %v300
    %330 = vmatprep.subr.mxu0 %v299
    %331 = vmatpush1.msra.mxu0 %v298
    %332 = vmatprep.subr.mxu0 %v297
    %333 = vmatpush1.msra.mxu0 %v296
    %334 = vmatprep.subr.mxu0 %v295
    %335 = vmatpush1.msra.mxu0 %v294
    %336 = vmatprep.subr.mxu0 %v293
    %337 = vmatpush1.msra.mxu0 %v292
    %338 = vmatprep.subr.mxu0 %v291
    %339 = vmatpush1.msra.mxu0 %v290
    %340 = vmatprep.subr.mxu0 %v289
    %341 = vmatpush1.msra.mxu0 %v288
    %342 = vmatprep.subr.mxu0 0.0
    %343 = vmatpush2.msra.mxu0 0.0
    %344 = vmatprep.subr.mxu0 0.0
    %345 = vmatpush2.msra.mxu0 0.0
    %346 = vmatprep.subr.mxu0 0.0
    %347 = vmatpush2.msra.mxu0 0.0
    %348 = vmatprep.subr.mxu0 0.0
    %349 = vmatpush2.msra.mxu0 0.0
    %350 = vmatprep.subr.mxu0 0.0
    %351 = vmatpush2.msra.mxu0 0.0
    %352 = vmatprep.subr.mxu0 0.0
    %353 = vmatpush2.msra.mxu0 0.0
    %354 = vmatprep.subr.mxu0 0.0
    %355 = vmatpush2.msra.mxu0 0.0
    %356 = vmatprep.subr.mxu0 0.0
    %357 = vmatpush2.msra.mxu0 0.0
    %358 = vmatprep.subr.mxu0 0.0
    %359 = vmatpush2.msra.mxu0 0.0
    %360 = vmatprep.subr.mxu0 0.0
    %361 = vmatpush2.msra.mxu0 0.0
    %362 = vmatprep.subr.mxu0 0.0
    %363 = vmatpush2.msra.mxu0 0.0
    %364 = vmatprep.subr.mxu0 0.0
    %365 = vmatpush2.msra.mxu0 0.0
    %366 = vmatprep.subr.mxu0 0.0
    %367 = vmatpush2.msra.mxu0 0.0
    %368 = vmatprep.subr.mxu0 0.0
    %369 = vmatpush2.msra.mxu0 0.0
    %370 = vmatprep.subr.mxu0 0.0
    %371 = vmatpush2.msra.mxu0 0.0
    %372 = vmatprep.subr.mxu0 0.0
    %373 = vmatpush2.msra.mxu0 0.0
    %374 = vmatprep.mubr.f32.mxu0 0.0
    %375 = vmatmul.mubr.f32.gmra.mxu0 %v308
    %v376 = vpop.f32.mrf.mxu0
    %v377 = vadd.f32 0.0, %v376
    %v378 = vpop.f32.mrf.mxu0
    %v379 = vadd.f32 0.0, %v378
    %380 = vdwg.mxu0
    %v381 = vadd.f32 %v304, %v377
    %v382 = vadd.f32 %v305, %v379
    %v383 = vxor.u32 %v381, 2147483648
    %v384 = vxor.u32 %v382, 2147483648
    %v385 = vmul.f32 %v383, 1.442695
    %v386 = vpow.pop %v385
    %v387 = vmul.f32 %v384, 1.442695
    %v388 = vpow.pop %v387
    %v389 = vadd.f32 %v386, 1.0
    %v390 = vadd.f32 %v388, 1.0
    %v391 = vrcp.pop %v389
    %v392 = vmul.f32 1.0, %v391
    %v393 = vrcp.pop %v390
    %v394 = vmul.f32 1.0, %v393
    %v395 = vtanh.pop %v382
    %v396 = vmul.f32 %v392, 0.0
    %398 = vrot.lane.b32.xlu0 %v395, 64
    %v399 = vpop.permute.xlu0 %398
    %v401 = vmul.f32 %v392, %v399
    %403 = vrot.lane.b32.xlu0 %v401, 64
    %v404 = vpop.permute.xlu0 %403
    %v406 = vadd.f32 %v396, %v404
    %v407 = vtanh.pop %v406
    %409 = vrot.lane.b32.xlu0 %v407, 64
    %v410 = vpop.permute.xlu0 %409
    %v412 = vmul.f32 %v394, %v410
    %s413 = scalar_lea.vmem [#allocation2], 16
    %v414 = vld [vmem:[%s413] sm:$0xff]
    %v415 = vld [vmem:[%s413 + $0x8] sm:$0xff]
    %v417 = vsel %vm306, %v412, 0
    %419 = vmatprep.subr.mxu0 0.0
    %420 = vmatpush1.msra.mxu0 0.0
    %421 = vmatprep.subr.mxu0 0.0
    %422 = vmatpush1.msra.mxu0 0.0
    %423 = vmatprep.subr.mxu0 0.0
    %424 = vmatpush1.msra.mxu0 0.0
    %425 = vmatprep.subr.mxu0 0.0
    %426 = vmatpush1.msra.mxu0 0.0
    %427 = vmatprep.subr.mxu0 0.0
    %428 = vmatpush1.msra.mxu0 0.0
    %429 = vmatprep.subr.mxu0 0.0
    %430 = vmatpush1.msra.mxu0 0.0
    %431 = vmatprep.subr.mxu0 0.0
    %432 = vmatpush1.msra.mxu0 0.0
    %433 = vmatprep.subr.mxu0 0.0
    %434 = vmatpush1.msra.mxu0 0.0
    %435 = vmatprep.subr.mxu0 %v303
    %436 = vmatpush1.msra.mxu0 %v302
    %437 = vmatprep.subr.mxu0 %v301
    %438 = vmatpush1.msra.mxu0 %v300
    %439 = vmatprep.subr.mxu0 %v299
    %440 = vmatpush1.msra.mxu0 %v298
    %441 = vmatprep.subr.mxu0 %v297
    %442 = vmatpush1.msra.mxu0 %v296
    %443 = vmatprep.subr.mxu0 %v295
    %444 = vmatpush1.msra.mxu0 %v294
    %445 = vmatprep.subr.mxu0 %v293
    %446 = vmatpush1.msra.mxu0 %v292
    %447 = vmatprep.subr.mxu0 %v291
    %448 = vmatpush1.msra.mxu0 %v290
    %449 = vmatprep.subr.mxu0 %v289
    %450 = vmatpush1.msra.mxu0 %v288
    %451 = vmatprep.subr.mxu0 0.0
    %452 = vmatpush2.msra.mxu0 0.0
    %453 = vmatprep.subr.mxu0 0.0
    %454 = vmatpush2.msra.mxu0 0.0
    %455 = vmatprep.subr.mxu0 0.0
    %456 = vmatpush2.msra.mxu0 0.0
    %457 = vmatprep.subr.mxu0 0.0
    %458 = vmatpush2.msra.mxu0 0.0
    %459 = vmatprep.subr.mxu0 0.0
    %460 = vmatpush2.msra.mxu0 0.0
    %461 = vmatprep.subr.mxu0 0.0
    %462 = vmatpush2.msra.mxu0 0.0
    %463 = vmatprep.subr.mxu0 0.0
    %464 = vmatpush2.msra.mxu0 0.0
    %465 = vmatprep.subr.mxu0 0.0
    %466 = vmatpush2.msra.mxu0 0.0
    %467 = vmatprep.subr.mxu0 0.0
    %468 = vmatpush2.msra.mxu0 0.0
    %469 = vmatprep.subr.mxu0 0.0
    %470 = vmatpush2.msra.mxu0 0.0
    %471 = vmatprep.subr.mxu0 0.0
    %472 = vmatpush2.msra.mxu0 0.0
    %473 = vmatprep.subr.mxu0 0.0
    %474 = vmatpush2.msra.mxu0 0.0
    %475 = vmatprep.subr.mxu0 0.0
    %476 = vmatpush2.msra.mxu0 0.0
    %477 = vmatprep.subr.mxu0 0.0
    %478 = vmatpush2.msra.mxu0 0.0
    %479 = vmatprep.subr.mxu0 0.0
    %480 = vmatpush2.msra.mxu0 0.0
    %481 = vmatprep.subr.mxu0 0.0
    %482 = vmatpush2.msra.mxu0 0.0
    %483 = vmatprep.mubr.f32.mxu0 0.0
    %484 = vmatmul.mubr.f32.gmra.mxu0 %v417
    %v485 = vpop.f32.mrf.mxu0
    %v486 = vadd.f32 0.0, %v485
    %v487 = vpop.f32.mrf.mxu0
    %v488 = vadd.f32 0.0, %v487
    %489 = vdwg.mxu0
    %v490 = vadd.f32 %v414, %v486
    %v491 = vadd.f32 %v415, %v488
    %v492 = vxor.u32 %v490, 2147483648
    %v493 = vxor.u32 %v491, 2147483648
    %v494 = vmul.f32 %v492, 1.442695
    %v495 = vpow.pop %v494
    %v496 = vmul.f32 %v493, 1.442695
    %v497 = vpow.pop %v496
    %v498 = vadd.f32 %v495, 1.0
    %v499 = vadd.f32 %v497, 1.0
    %v500 = vrcp.pop %v498
    %v501 = vmul.f32 1.0, %v500
    %v502 = vrcp.pop %v499
    %v503 = vmul.f32 1.0, %v502
    %v504 = vtanh.pop %v491
    %v505 = vmul.f32 %v501, %v406
    %507 = vrot.lane.b32.xlu0 %v504, 64
    %v508 = vpop.permute.xlu0 %507
    %v510 = vmul.f32 %v501, %v508
    %512 = vrot.lane.b32.xlu0 %v510, 64
    %v513 = vpop.permute.xlu0 %512
    %v515 = vadd.f32 %v505, %v513
    %v516 = vtanh.pop %v515
    %518 = vrot.lane.b32.xlu0 %v516, 64
    %v519 = vpop.permute.xlu0 %518
    %v521 = vmul.f32 %v503, %v519
    %s522 = scalar_lea.vmem [#allocation2], 32
    %v523 = vld [vmem:[%s522] sm:$0xff]
    %v524 = vld [vmem:[%s522 + $0x8] sm:$0xff]
    %v526 = vsel %vm306, %v521, 0
    %528 = vmatprep.subr.mxu0 0.0
    %529 = vmatpush1.msra.mxu0 0.0
    %530 = vmatprep.subr.mxu0 0.0
    %531 = vmatpush1.msra.mxu0 0.0
    %532 = vmatprep.subr.mxu0 0.0
    %533 = vmatpush1.msra.mxu0 0.0
    %534 = vmatprep.subr.mxu0 0.0
    %535 = vmatpush1.msra.mxu0 0.0
    %536 = vmatprep.subr.mxu0 0.0
    %537 = vmatpush1.msra.mxu0 0.0
    %538 = vmatprep.subr.mxu0 0.0
    %539 = vmatpush1.msra.mxu0 0.0
    %540 = vmatprep.subr.mxu0 0.0
    %541 = vmatpush1.msra.mxu0 0.0
    %542 = vmatprep.subr.mxu0 0.0
    %543 = vmatpush1.msra.mxu0 0.0
    %544 = vmatprep.subr.mxu0 %v303
    %545 = vmatpush1.msra.mxu0 %v302
    %546 = vmatprep.subr.mxu0 %v301
    %547 = vmatpush1.msra.mxu0 %v300
    %548 = vmatprep.subr.mxu0 %v299
    %549 = vmatpush1.msra.mxu0 %v298
    %550 = vmatprep.subr.mxu0 %v297
    %551 = vmatpush1.msra.mxu0 %v296
    %552 = vmatprep.subr.mxu0 %v295
    %553 = vmatpush1.msra.mxu0 %v294
    %554 = vmatprep.subr.mxu0 %v293
    %555 = vmatpush1.msra.mxu0 %v292
    %556 = vmatprep.subr.mxu0 %v291
    %557 = vmatpush1.msra.mxu0 %v290
    %558 = vmatprep.subr.mxu0 %v289
    %559 = vmatpush1.msra.mxu0 %v288
    %560 = vmatprep.subr.mxu0 0.0
    %561 = vmatpush2.msra.mxu0 0.0
    %562 = vmatprep.subr.mxu0 0.0
    %563 = vmatpush2.msra.mxu0 0.0
    %564 = vmatprep.subr.mxu0 0.0
    %565 = vmatpush2.msra.mxu0 0.0
    %566 = vmatprep.subr.mxu0 0.0
    %567 = vmatpush2.msra.mxu0 0.0
    %568 = vmatprep.subr.mxu0 0.0
    %569 = vmatpush2.msra.mxu0 0.0
    %570 = vmatprep.subr.mxu0 0.0
    %571 = vmatpush2.msra.mxu0 0.0
    %572 = vmatprep.subr.mxu0 0.0
    %573 = vmatpush2.msra.mxu0 0.0
    %574 = vmatprep.subr.mxu0 0.0
    %575 = vmatpush2.msra.mxu0 0.0
    %576 = vmatprep.subr.mxu0 0.0
    %577 = vmatpush2.msra.mxu0 0.0
    %578 = vmatprep.subr.mxu0 0.0
    %579 = vmatpush2.msra.mxu0 0.0
    %580 = vmatprep.subr.mxu0 0.0
    %581 = vmatpush2.msra.mxu0 0.0
    %582 = vmatprep.subr.mxu0 0.0
    %583 = vmatpush2.msra.mxu0 0.0
    %584 = vmatprep.subr.mxu0 0.0
    %585 = vmatpush2.msra.mxu0 0.0
    %586 = vmatprep.subr.mxu0 0.0
    %587 = vmatpush2.msra.mxu0 0.0
    %588 = vmatprep.subr.mxu0 0.0
    %589 = vmatpush2.msra.mxu0 0.0
    %590 = vmatprep.subr.mxu0 0.0
    %591 = vmatpush2.msra.mxu0 0.0
    %592 = vmatprep.mubr.f32.mxu0 0.0
    %593 = vmatmul.mubr.f32.gmra.mxu0 %v526
    %v594 = vpop.f32.mrf.mxu0
    %v595 = vadd.f32 0.0, %v594
    %v596 = vpop.f32.mrf.mxu0
    %v597 = vadd.f32 0.0, %v596
    %598 = vdwg.mxu0
    %v599 = vadd.f32 %v523, %v595
    %v600 = vadd.f32 %v524, %v597
    %v601 = vxor.u32 %v599, 2147483648
    %v602 = vxor.u32 %v600, 2147483648
    %v603 = vmul.f32 %v601, 1.442695
    %v604 = vpow.pop %v603
    %v605 = vmul.f32 %v602, 1.442695
    %v606 = vpow.pop %v605
    %v607 = vadd.f32 %v604, 1.0
    %v608 = vadd.f32 %v606, 1.0
    %v609 = vrcp.pop %v607
    %v610 = vmul.f32 1.0, %v609
    %v611 = vrcp.pop %v608
    %v612 = vmul.f32 1.0, %v611
    %v613 = vtanh.pop %v600
    %v614 = vmul.f32 %v610, %v515
    %616 = vrot.lane.b32.xlu0 %v613, 64
    %v617 = vpop.permute.xlu0 %616
    %v619 = vmul.f32 %v610, %v617
    %621 = vrot.lane.b32.xlu0 %v619, 64
    %v622 = vpop.permute.xlu0 %621
    %v624 = vadd.f32 %v614, %v622
    %v625 = vtanh.pop %v624
    %627 = vrot.lane.b32.xlu0 %v625, 64
    %v628 = vpop.permute.xlu0 %627
    %v630 = vmul.f32 %v612, %v628
    %s631 = scalar_lea.vmem [#allocation2], 48
    %v632 = vld [vmem:[%s631] sm:$0xff]
    %v633 = vld [vmem:[%s631 + $0x8] sm:$0xff]
    %v635 = vsel %vm306, %v630, 0
    %637 = vmatprep.subr.mxu0 0.0
    %638 = vmatpush1.msra.mxu0 0.0
    %639 = vmatprep.subr.mxu0 0.0
    %640 = vmatpush1.msra.mxu0 0.0
    %641 = vmatprep.subr.mxu0 0.0
    %642 = vmatpush1.msra.mxu0 0.0
    %643 = vmatprep.subr.mxu0 0.0
    %644 = vmatpush1.msra.mxu0 0.0
    %645 = vmatprep.subr.mxu0 0.0
    %646 = vmatpush1.msra.mxu0 0.0
    %647 = vmatprep.subr.mxu0 0.0
    %648 = vmatpush1.msra.mxu0 0.0
    %649 = vmatprep.subr.mxu0 0.0
    %650 = vmatpush1.msra.mxu0 0.0
    %651 = vmatprep.subr.mxu0 0.0
    %652 = vmatpush1.msra.mxu0 0.0
    %653 = vmatprep.subr.mxu0 %v303
    %654 = vmatpush1.msra.mxu0 %v302
    %655 = vmatprep.subr.mxu0 %v301
    %656 = vmatpush1.msra.mxu0 %v300
    %657 = vmatprep.subr.mxu0 %v299
    %658 = vmatpush1.msra.mxu0 %v298
    %659 = vmatprep.subr.mxu0 %v297
    %660 = vmatpush1.msra.mxu0 %v296
    %661 = vmatprep.subr.mxu0 %v295
    %662 = vmatpush1.msra.mxu0 %v294
    %663 = vmatprep.subr.mxu0 %v293
    %664 = vmatpush1.msra.mxu0 %v292
    %665 = vmatprep.subr.mxu0 %v291
    %666 = vmatpush1.msra.mxu0 %v290
    %667 = vmatprep.subr.mxu0 %v289
    %668 = vmatpush1.msra.mxu0 %v288
    %669 = vmatprep.subr.mxu0 0.0
    %670 = vmatpush2.msra.mxu0 0.0
    %671 = vmatprep.subr.mxu0 0.0
    %672 = vmatpush2.msra.mxu0 0.0
    %673 = vmatprep.subr.mxu0 0.0
    %674 = vmatpush2.msra.mxu0 0.0
    %675 = vmatprep.subr.mxu0 0.0
    %676 = vmatpush2.msra.mxu0 0.0
    %677 = vmatprep.subr.mxu0 0.0
    %678 = vmatpush2.msra.mxu0 0.0
    %679 = vmatprep.subr.mxu0 0.0
    %680 = vmatpush2.msra.mxu0 0.0
    %681 = vmatprep.subr.mxu0 0.0
    %682 = vmatpush2.msra.mxu0 0.0
    %683 = vmatprep.subr.mxu0 0.0
    %684 = vmatpush2.msra.mxu0 0.0
    %685 = vmatprep.subr.mxu0 0.0
    %686 = vmatpush2.msra.mxu0 0.0
    %687 = vmatprep.subr.mxu0 0.0
    %688 = vmatpush2.msra.mxu0 0.0
    %689 = vmatprep.subr.mxu0 0.0
    %690 = vmatpush2.msra.mxu0 0.0
    %691 = vmatprep.subr.mxu0 0.0
    %692 = vmatpush2.msra.mxu0 0.0
    %693 = vmatprep.subr.mxu0 0.0
    %694 = vmatpush2.msra.mxu0 0.0
    %695 = vmatprep.subr.mxu0 0.0
    %696 = vmatpush2.msra.mxu0 0.0
    %697 = vmatprep.subr.mxu0 0.0
    %698 = vmatpush2.msra.mxu0 0.0
    %699 = vmatprep.subr.mxu0 0.0
    %700 = vmatpush2.msra.mxu0 0.0
    %701 = vmatprep.mubr.f32.mxu0 0.0
    %702 = vmatmul.mubr.f32.gmra.mxu0 %v635
    %v703 = vpop.f32.mrf.mxu0
    %v704 = vadd.f32 0.0, %v703
    %v705 = vpop.f32.mrf.mxu0
    %v706 = vadd.f32 0.0, %v705
    %707 = vdwg.mxu0
    %v708 = vadd.f32 %v632, %v704
    %v709 = vadd.f32 %v633, %v706
    %v710 = vxor.u32 %v708, 2147483648
    %v711 = vxor.u32 %v709, 2147483648
    %v712 = vmul.f32 %v710, 1.442695
    %v713 = vpow.pop %v712
    %v714 = vmul.f32 %v711, 1.442695
    %v715 = vpow.pop %v714
    %v716 = vadd.f32 %v713, 1.0
    %v717 = vadd.f32 %v715, 1.0
    %v718 = vrcp.pop %v716
    %v719 = vmul.f32 1.0, %v718
    %v720 = vrcp.pop %v717
    %v721 = vmul.f32 1.0, %v720
    %v722 = vtanh.pop %v709
    %v723 = vmul.f32 %v719, %v624
    %725 = vrot.lane.b32.xlu0 %v722, 64
    %v726 = vpop.permute.xlu0 %725
    %v728 = vmul.f32 %v719, %v726
    %730 = vrot.lane.b32.xlu0 %v728, 64
    %v731 = vpop.permute.xlu0 %730
    %v733 = vadd.f32 %v723, %v731
    %v734 = vtanh.pop %v733
    %736 = vrot.lane.b32.xlu0 %v734, 64
    %v737 = vpop.permute.xlu0 %736
    %v739 = vmul.f32 %v721, %v737
    %s740 = scalar_lea.vmem [#allocation2], 64
    %v741 = vld [vmem:[%s740] sm:$0xff]
    %v742 = vld [vmem:[%s740 + $0x8] sm:$0xff]
    %v744 = vsel %vm306, %v739, 0
    %746 = vmatprep.subr.mxu0 0.0
    %747 = vmatpush1.msra.mxu0 0.0
    %748 = vmatprep.subr.mxu0 0.0
    %749 = vmatpush1.msra.mxu0 0.0
    %750 = vmatprep.subr.mxu0 0.0
    %751 = vmatpush1.msra.mxu0 0.0
    %752 = vmatprep.subr.mxu0 0.0
    %753 = vmatpush1.msra.mxu0 0.0
    %754 = vmatprep.subr.mxu0 0.0
    %755 = vmatpush1.msra.mxu0 0.0
    %756 = vmatprep.subr.mxu0 0.0
    %757 = vmatpush1.msra.mxu0 0.0
    %758 = vmatprep.subr.mxu0 0.0
    %759 = vmatpush1.msra.mxu0 0.0
    %760 = vmatprep.subr.mxu0 0.0
    %761 = vmatpush1.msra.mxu0 0.0
    %762 = vmatprep.subr.mxu0 %v303
    %763 = vmatpush1.msra.mxu0 %v302
    %764 = vmatprep.subr.mxu0 %v301
    %765 = vmatpush1.msra.mxu0 %v300
    %766 = vmatprep.subr.mxu0 %v299
    %767 = vmatpush1.msra.mxu0 %v298
    %768 = vmatprep.subr.mxu0 %v297
    %769 = vmatpush1.msra.mxu0 %v296
    %770 = vmatprep.subr.mxu0 %v295
    %771 = vmatpush1.msra.mxu0 %v294
    %772 = vmatprep.subr.mxu0 %v293
    %773 = vmatpush1.msra.mxu0 %v292
    %774 = vmatprep.subr.mxu0 %v291
    %775 = vmatpush1.msra.mxu0 %v290
    %776 = vmatprep.subr.mxu0 %v289
    %777 = vmatpush1.msra.mxu0 %v288
    %778 = vmatprep.subr.mxu0 0.0
    %779 = vmatpush2.msra.mxu0 0.0
    %780 = vmatprep.subr.mxu0 0.0
    %781 = vmatpush2.msra.mxu0 0.0
    %782 = vmatprep.subr.mxu0 0.0
    %783 = vmatpush2.msra.mxu0 0.0
    %784 = vmatprep.subr.mxu0 0.0
    %785 = vmatpush2.msra.mxu0 0.0
    %786 = vmatprep.subr.mxu0 0.0
    %787 = vmatpush2.msra.mxu0 0.0
    %788 = vmatprep.subr.mxu0 0.0
    %789 = vmatpush2.msra.mxu0 0.0
    %790 = vmatprep.subr.mxu0 0.0
    %791 = vmatpush2.msra.mxu0 0.0
    %792 = vmatprep.subr.mxu0 0.0
    %793 = vmatpush2.msra.mxu0 0.0
    %794 = vmatprep.subr.mxu0 0.0
    %795 = vmatpush2.msra.mxu0 0.0
    %796 = vmatprep.subr.mxu0 0.0
    %797 = vmatpush2.msra.mxu0 0.0
    %798 = vmatprep.subr.mxu0 0.0
    %799 = vmatpush2.msra.mxu0 0.0
    %800 = vmatprep.subr.mxu0 0.0
    %801 = vmatpush2.msra.mxu0 0.0
    %802 = vmatprep.subr.mxu0 0.0
    %803 = vmatpush2.msra.mxu0 0.0
    %804 = vmatprep.subr.mxu0 0.0
    %805 = vmatpush2.msra.mxu0 0.0
    %806 = vmatprep.subr.mxu0 0.0
    %807 = vmatpush2.msra.mxu0 0.0
    %808 = vmatprep.subr.mxu0 0.0
    %809 = vmatpush2.msra.mxu0 0.0
    %810 = vmatprep.mubr.f32.mxu0 0.0
    %811 = vmatmul.mubr.f32.gmra.mxu0 %v744
    %v812 = vpop.f32.mrf.mxu0
    %v813 = vadd.f32 0.0, %v812
    %v814 = vpop.f32.mrf.mxu0
    %v815 = vadd.f32 0.0, %v814
    %816 = vdwg.mxu0
    %v817 = vadd.f32 %v741, %v813
    %v818 = vadd.f32 %v742, %v815
    %v819 = vxor.u32 %v817, 2147483648
    %v820 = vxor.u32 %v818, 2147483648
    %v821 = vmul.f32 %v819, 1.442695
    %v822 = vpow.pop %v821
    %v823 = vmul.f32 %v820, 1.442695
    %v824 = vpow.pop %v823
    %v825 = vadd.f32 %v822, 1.0
    %v826 = vadd.f32 %v824, 1.0
    %v827 = vrcp.pop %v825
    %v828 = vmul.f32 1.0, %v827
    %v829 = vrcp.pop %v826
    %v830 = vmul.f32 1.0, %v829
    %v831 = vtanh.pop %v818
    %v832 = vmul.f32 %v828, %v733
    %834 = vrot.lane.b32.xlu0 %v831, 64
    %v835 = vpop.permute.xlu0 %834
    %v837 = vmul.f32 %v828, %v835
    %839 = vrot.lane.b32.xlu0 %v837, 64
    %v840 = vpop.permute.xlu0 %839
    %v842 = vadd.f32 %v832, %v840
    %v843 = vtanh.pop %v842
    %845 = vrot.lane.b32.xlu0 %v843, 64
    %v846 = vpop.permute.xlu0 %845
    %v848 = vmul.f32 %v830, %v846
    %s849 = scalar_lea.vmem [#allocation2], 80
    %v850 = vld [vmem:[%s849] sm:$0xff]
    %v851 = vld [vmem:[%s849 + $0x8] sm:$0xff]
    %v853 = vsel %vm306, %v848, 0
    %855 = vmatprep.subr.mxu0 0.0
    %856 = vmatpush1.msra.mxu0 0.0
    %857 = vmatprep.subr.mxu0 0.0
    %858 = vmatpush1.msra.mxu0 0.0
    %859 = vmatprep.subr.mxu0 0.0
    %860 = vmatpush1.msra.mxu0 0.0
    %861 = vmatprep.subr.mxu0 0.0
    %862 = vmatpush1.msra.mxu0 0.0
    %863 = vmatprep.subr.mxu0 0.0
    %864 = vmatpush1.msra.mxu0 0.0
    %865 = vmatprep.subr.mxu0 0.0
    %866 = vmatpush1.msra.mxu0 0.0
    %867 = vmatprep.subr.mxu0 0.0
    %868 = vmatpush1.msra.mxu0 0.0
    %869 = vmatprep.subr.mxu0 0.0
    %870 = vmatpush1.msra.mxu0 0.0
    %871 = vmatprep.subr.mxu0 %v303
    %872 = vmatpush1.msra.mxu0 %v302
    %873 = vmatprep.subr.mxu0 %v301
    %874 = vmatpush1.msra.mxu0 %v300
    %875 = vmatprep.subr.mxu0 %v299
    %876 = vmatpush1.msra.mxu0 %v298
    %877 = vmatprep.subr.mxu0 %v297
    %878 = vmatpush1.msra.mxu0 %v296
    %879 = vmatprep.subr.mxu0 %v295
    %880 = vmatpush1.msra.mxu0 %v294
    %881 = vmatprep.subr.mxu0 %v293
    %882 = vmatpush1.msra.mxu0 %v292
    %883 = vmatprep.subr.mxu0 %v291
    %884 = vmatpush1.msra.mxu0 %v290
    %885 = vmatprep.subr.mxu0 %v289
    %886 = vmatpush1.msra.mxu0 %v288
    %887 = vmatprep.subr.mxu0 0.0
    %888 = vmatpush2.msra.mxu0 0.0
    %889 = vmatprep.subr.mxu0 0.0
    %890 = vmatpush2.msra.mxu0 0.0
    %891 = vmatprep.subr.mxu0 0.0
    %892 = vmatpush2.msra.mxu0 0.0
    %893 = vmatprep.subr.mxu0 0.0
    %894 = vmatpush2.msra.mxu0 0.0
    %895 = vmatprep.subr.mxu0 0.0
    %896 = vmatpush2.msra.mxu0 0.0
    %897 = vmatprep.subr.mxu0 0.0
    %898 = vmatpush2.msra.mxu0 0.0
    %899 = vmatprep.subr.mxu0 0.0
    %900 = vmatpush2.msra.mxu0 0.0
    %901 = vmatprep.subr.mxu0 0.0
    %902 = vmatpush2.msra.mxu0 0.0
    %903 = vmatprep.subr.mxu0 0.0
    %904 = vmatpush2.msra.mxu0 0.0
    %905 = vmatprep.subr.mxu0 0.0
    %906 = vmatpush2.msra.mxu0 0.0
    %907 = vmatprep.subr.mxu0 0.0
    %908 = vmatpush2.msra.mxu0 0.0
    %909 = vmatprep.subr.mxu0 0.0
    %910 = vmatpush2.msra.mxu0 0.0
    %911 = vmatprep.subr.mxu0 0.0
    %912 = vmatpush2.msra.mxu0 0.0
    %913 = vmatprep.subr.mxu0 0.0
    %914 = vmatpush2.msra.mxu0 0.0
    %915 = vmatprep.subr.mxu0 0.0
    %916 = vmatpush2.msra.mxu0 0.0
    %917 = vmatprep.subr.mxu0 0.0
    %918 = vmatpush2.msra.mxu0 0.0
    %919 = vmatprep.mubr.f32.mxu0 0.0
    %920 = vmatmul.mubr.f32.gmra.mxu0 %v853
    %v921 = vpop.f32.mrf.mxu0
    %v922 = vadd.f32 0.0, %v921
    %v923 = vpop.f32.mrf.mxu0
    %v924 = vadd.f32 0.0, %v923
    %925 = vdwg.mxu0
    %v926 = vadd.f32 %v850, %v922
    %v927 = vadd.f32 %v851, %v924
    %v928 = vxor.u32 %v926, 2147483648
    %v929 = vxor.u32 %v927, 2147483648
    %v930 = vmul.f32 %v928, 1.442695
    %v931 = vpow.pop %v930
    %v932 = vmul.f32 %v929, 1.442695
    %v933 = vpow.pop %v932
    %v934 = vadd.f32 %v931, 1.0
    %v935 = vadd.f32 %v933, 1.0
    %v936 = vrcp.pop %v934
    %v937 = vmul.f32 1.0, %v936
    %v938 = vrcp.pop %v935
    %v939 = vmul.f32 1.0, %v938
    %v940 = vtanh.pop %v927
    %v941 = vmul.f32 %v937, %v842
    %943 = vrot.lane.b32.xlu0 %v940, 64
    %v944 = vpop.permute.xlu0 %943
    %v946 = vmul.f32 %v937, %v944
    %948 = vrot.lane.b32.xlu0 %v946, 64
    %v949 = vpop.permute.xlu0 %948
    %v951 = vadd.f32 %v941, %v949
    %v952 = vtanh.pop %v951
    %954 = vrot.lane.b32.xlu0 %v952, 64
    %v955 = vpop.permute.xlu0 %954
    %v957 = vmul.f32 %v939, %v955
    %s958 = scalar_lea.vmem [#allocation2], 96
    %v959 = vld [vmem:[%s958] sm:$0xff]
    %v960 = vld [vmem:[%s958 + $0x8] sm:$0xff]
    %v962 = vsel %vm306, %v957, 0
    %964 = vmatprep.subr.mxu0 0.0
    %965 = vmatpush1.msra.mxu0 0.0
    %966 = vmatprep.subr.mxu0 0.0
    %967 = vmatpush1.msra.mxu0 0.0
    %968 = vmatprep.subr.mxu0 0.0
    %969 = vmatpush1.msra.mxu0 0.0
    %970 = vmatprep.subr.mxu0 0.0
    %971 = vmatpush1.msra.mxu0 0.0
    %972 = vmatprep.subr.mxu0 0.0
    %973 = vmatpush1.msra.mxu0 0.0
    %974 = vmatprep.subr.mxu0 0.0
    %975 = vmatpush1.msra.mxu0 0.0
    %976 = vmatprep.subr.mxu0 0.0
    %977 = vmatpush1.msra.mxu0 0.0
    %978 = vmatprep.subr.mxu0 0.0
    %979 = vmatpush1.msra.mxu0 0.0
    %980 = vmatprep.subr.mxu0 %v303
    %981 = vmatpush1.msra.mxu0 %v302
    %982 = vmatprep.subr.mxu0 %v301
    %983 = vmatpush1.msra.mxu0 %v300
    %984 = vmatprep.subr.mxu0 %v299
    %985 = vmatpush1.msra.mxu0 %v298
    %986 = vmatprep.subr.mxu0 %v297
    %987 = vmatpush1.msra.mxu0 %v296
    %988 = vmatprep.subr.mxu0 %v295
    %989 = vmatpush1.msra.mxu0 %v294
    %990 = vmatprep.subr.mxu0 %v293
    %991 = vmatpush1.msra.mxu0 %v292
    %992 = vmatprep.subr.mxu0 %v291
    %993 = vmatpush1.msra.mxu0 %v290
    %994 = vmatprep.subr.mxu0 %v289
    %995 = vmatpush1.msra.mxu0 %v288
    %996 = vmatprep.subr.mxu0 0.0
    %997 = vmatpush2.msra.mxu0 0.0
    %998 = vmatprep.subr.mxu0 0.0
    %999 = vmatpush2.msra.mxu0 0.0
    %1000 = vmatprep.subr.mxu0 0.0
    %1001 = vmatpush2.msra.mxu0 0.0
    %1002 = vmatprep.subr.mxu0 0.0
    %1003 = vmatpush2.msra.mxu0 0.0
    %1004 = vmatprep.subr.mxu0 0.0
    %1005 = vmatpush2.msra.mxu0 0.0
    %1006 = vmatprep.subr.mxu0 0.0
    %1007 = vmatpush2.msra.mxu0 0.0
    %1008 = vmatprep.subr.mxu0 0.0
    %1009 = vmatpush2.msra.mxu0 0.0
    %1010 = vmatprep.subr.mxu0 0.0
    %1011 = vmatpush2.msra.mxu0 0.0
    %1012 = vmatprep.subr.mxu0 0.0
    %1013 = vmatpush2.msra.mxu0 0.0
    %1014 = vmatprep.subr.mxu0 0.0
    %1015 = vmatpush2.msra.mxu0 0.0
    %1016 = vmatprep.subr.mxu0 0.0
    %1017 = vmatpush2.msra.mxu0 0.0
    %1018 = vmatprep.subr.mxu0 0.0
    %1019 = vmatpush2.msra.mxu0 0.0
    %1020 = vmatprep.subr.mxu0 0.0
    %1021 = vmatpush2.msra.mxu0 0.0
    %1022 = vmatprep.subr.mxu0 0.0
    %1023 = vmatpush2.msra.mxu0 0.0
    %1024 = vmatprep.subr.mxu0 0.0
    %1025 = vmatpush2.msra.mxu0 0.0
    %1026 = vmatprep.subr.mxu0 0.0
    %1027 = vmatpush2.msra.mxu0 0.0
    %1028 = vmatprep.mubr.f32.mxu0 0.0
    %1029 = vmatmul.mubr.f32.gmra.mxu0 %v962
    %v1030 = vpop.f32.mrf.mxu0
    %v1031 = vadd.f32 0.0, %v1030
    %v1032 = vpop.f32.mrf.mxu0
    %v1033 = vadd.f32 0.0, %v1032
    %1034 = vdwg.mxu0
    %v1035 = vadd.f32 %v959, %v1031
    %v1036 = vadd.f32 %v960, %v1033
    %v1037 = vxor.u32 %v1035, 2147483648
    %v1038 = vxor.u32 %v1036, 2147483648
    %v1039 = vmul.f32 %v1037, 1.442695
    %v1040 = vpow.pop %v1039
    %v1041 = vmul.f32 %v1038, 1.442695
    %v1042 = vpow.pop %v1041
    %v1043 = vadd.f32 %v1040, 1.0
    %v1044 = vadd.f32 %v1042, 1.0
    %v1045 = vrcp.pop %v1043
    %v1046 = vmul.f32 1.0, %v1045
    %v1047 = vrcp.pop %v1044
    %v1048 = vmul.f32 1.0, %v1047
    %v1049 = vtanh.pop %v1036
    %v1050 = vmul.f32 %v1046, %v951
    %1052 = vrot.lane.b32.xlu0 %v1049, 64
    %v1053 = vpop.permute.xlu0 %1052
    %v1055 = vmul.f32 %v1046, %v1053
    %1057 = vrot.lane.b32.xlu0 %v1055, 64
    %v1058 = vpop.permute.xlu0 %1057
    %v1060 = vadd.f32 %v1050, %v1058
    %v1061 = vtanh.pop %v1060
    %1063 = vrot.lane.b32.xlu0 %v1061, 64
    %v1064 = vpop.permute.xlu0 %1063
    %v1066 = vmul.f32 %v1048, %v1064
    %s1067 = scalar_lea.vmem [#allocation2], 112
    %v1068 = vld [vmem:[%s1067] sm:$0xff]
    %v1069 = vld [vmem:[%s1067 + $0x8] sm:$0xff]
    %v1071 = vsel %vm306, %v1066, 0
    %1073 = vmatprep.subr.mxu0 0.0
    %1074 = vmatpush1.msra.mxu0 0.0
    %1075 = vmatprep.subr.mxu0 0.0
    %1076 = vmatpush1.msra.mxu0 0.0
    %1077 = vmatprep.subr.mxu0 0.0
    %1078 = vmatpush1.msra.mxu0 0.0
    %1079 = vmatprep.subr.mxu0 0.0
    %1080 = vmatpush1.msra.mxu0 0.0
    %1081 = vmatprep.subr.mxu0 0.0
    %1082 = vmatpush1.msra.mxu0 0.0
    %1083 = vmatprep.subr.mxu0 0.0
    %1084 = vmatpush1.msra.mxu0 0.0
    %1085 = vmatprep.subr.mxu0 0.0
    %1086 = vmatpush1.msra.mxu0 0.0
    %1087 = vmatprep.subr.mxu0 0.0
    %1088 = vmatpush1.msra.mxu0 0.0
    %1089 = vmatprep.subr.mxu0 %v303
    %1090 = vmatpush1.msra.mxu0 %v302
    %1091 = vmatprep.subr.mxu0 %v301
    %1092 = vmatpush1.msra.mxu0 %v300
    %1093 = vmatprep.subr.mxu0 %v299
    %1094 = vmatpush1.msra.mxu0 %v298
    %1095 = vmatprep.subr.mxu0 %v297
    %1096 = vmatpush1.msra.mxu0 %v296
    %1097 = vmatprep.subr.mxu0 %v295
    %1098 = vmatpush1.msra.mxu0 %v294
    %1099 = vmatprep.subr.mxu0 %v293
    %1100 = vmatpush1.msra.mxu0 %v292
    %1101 = vmatprep.subr.mxu0 %v291
    %1102 = vmatpush1.msra.mxu0 %v290
    %1103 = vmatprep.subr.mxu0 %v289
    %1104 = vmatpush1.msra.mxu0 %v288
    %1105 = vmatprep.subr.mxu0 0.0
    %1106 = vmatpush2.msra.mxu0 0.0
    %1107 = vmatprep.subr.mxu0 0.0
    %1108 = vmatpush2.msra.mxu0 0.0
    %1109 = vmatprep.subr.mxu0 0.0
    %1110 = vmatpush2.msra.mxu0 0.0
    %1111 = vmatprep.subr.mxu0 0.0
    %1112 = vmatpush2.msra.mxu0 0.0
    %1113 = vmatprep.subr.mxu0 0.0
    %1114 = vmatpush2.msra.mxu0 0.0
    %1115 = vmatprep.subr.mxu0 0.0
    %1116 = vmatpush2.msra.mxu0 0.0
    %1117 = vmatprep.subr.mxu0 0.0
    %1118 = vmatpush2.msra.mxu0 0.0
    %1119 = vmatprep.subr.mxu0 0.0
    %1120 = vmatpush2.msra.mxu0 0.0
    %1121 = vmatprep.subr.mxu0 0.0
    %1122 = vmatpush2.msra.mxu0 0.0
    %1123 = vmatprep.subr.mxu0 0.0
    %1124 = vmatpush2.msra.mxu0 0.0
    %1125 = vmatprep.subr.mxu0 0.0
    %1126 = vmatpush2.msra.mxu0 0.0
    %1127 = vmatprep.subr.mxu0 0.0
    %1128 = vmatpush2.msra.mxu0 0.0
    %1129 = vmatprep.subr.mxu0 0.0
    %1130 = vmatpush2.msra.mxu0 0.0
    %1131 = vmatprep.subr.mxu0 0.0
    %1132 = vmatpush2.msra.mxu0 0.0
    %1133 = vmatprep.subr.mxu0 0.0
    %1134 = vmatpush2.msra.mxu0 0.0
    %1135 = vmatprep.subr.mxu0 0.0
    %1136 = vmatpush2.msra.mxu0 0.0
    %1137 = vmatprep.mubr.f32.mxu0 0.0
    %1138 = vmatmul.mubr.f32.gmra.mxu0 %v1071
    %v1139 = vpop.f32.mrf.mxu0
    %v1140 = vadd.f32 0.0, %v1139
    %v1141 = vpop.f32.mrf.mxu0
    %v1142 = vadd.f32 0.0, %v1141
    %1143 = vdwg.mxu0
    %v1144 = vadd.f32 %v1068, %v1140
    %v1145 = vadd.f32 %v1069, %v1142
    %v1146 = vxor.u32 %v1144, 2147483648
    %v1147 = vxor.u32 %v1145, 2147483648
    %v1148 = vmul.f32 %v1146, 1.442695
    %v1149 = vpow.pop %v1148
    %v1150 = vmul.f32 %v1147, 1.442695
    %v1151 = vpow.pop %v1150
    %v1152 = vadd.f32 %v1149, 1.0
    %v1153 = vadd.f32 %v1151, 1.0
    %v1154 = vrcp.pop %v1152
    %v1155 = vmul.f32 1.0, %v1154
    %v1156 = vrcp.pop %v1153
    %v1157 = vmul.f32 1.0, %v1156
    %v1158 = vtanh.pop %v1145
    %v1159 = vmul.f32 %v1155, %v1060
    %1161 = vrot.lane.b32.xlu0 %v1158, 64
    %v1162 = vpop.permute.xlu0 %1161
    %v1164 = vmul.f32 %v1155, %v1162
    %1166 = vrot.lane.b32.xlu0 %v1164, 64
    %v1167 = vpop.permute.xlu0 %1166
    %v1169 = vadd.f32 %v1159, %v1167
    %v1170 = vtanh.pop %v1169
    %1172 = vrot.lane.b32.xlu0 %v1170, 64
    %v1173 = vpop.permute.xlu0 %1172
    %v1175 = vmul.f32 %v1157, %v1173
    %v1176 = vld [vmem:[%s4] sm:$0xff]
    %v1177 = vld [vmem:[%s4 + $0x8] sm:$0xff]
    %v1178 = vld [vmem:[%s4 + $0x10] sm:$0xff]
    %v1179 = vld [vmem:[%s4 + $0x18] sm:$0xff]
    %v1180 = vld [vmem:[%s4 + $0x20] sm:$0xff]
    %v1181 = vld [vmem:[%s4 + $0x28] sm:$0xff]
    %v1182 = vld [vmem:[%s4 + $0x30] sm:$0xff]
    %v1183 = vld [vmem:[%s4 + $0x38] sm:$0xff]
    %v1184 = vld [vmem:[%s5] sm:$0x1]
    %v1186 = vlaneseq
    %v1187 = vshrl.u32 %v1186, 7
    %v1188 = vsub.s32 0, %v1187
    %v1189 = vrot.slane %v1184, %v1188
    %v1192 = vsel %vm306, %v1175, 0
    %1194 = vmatprep.subr.mxu0 0.0
    %1195 = vmatpush1.msra.mxu0 0.0
    %1196 = vmatprep.subr.mxu0 0.0
    %1197 = vmatpush1.msra.mxu0 0.0
    %1198 = vmatprep.subr.mxu0 0.0
    %1199 = vmatpush1.msra.mxu0 0.0
    %1200 = vmatprep.subr.mxu0 0.0
    %1201 = vmatpush1.msra.mxu0 0.0
    %1202 = vmatprep.subr.mxu0 0.0
    %1203 = vmatpush1.msra.mxu0 0.0
    %1204 = vmatprep.subr.mxu0 0.0
    %1205 = vmatpush1.msra.mxu0 0.0
    %1206 = vmatprep.subr.mxu0 0.0
    %1207 = vmatpush1.msra.mxu0 0.0
    %1208 = vmatprep.subr.mxu0 0.0
    %1209 = vmatpush1.msra.mxu0 0.0
    %1210 = vmatprep.subr.mxu0 0.0
    %1211 = vmatpush1.msra.mxu0 %v1183
    %1212 = vmatprep.subr.mxu0 0.0
    %1213 = vmatpush1.msra.mxu0 %v1182
    %1214 = vmatprep.subr.mxu0 0.0
    %1215 = vmatpush1.msra.mxu0 %v1181
    %1216 = vmatprep.subr.mxu0 0.0
    %1217 = vmatpush1.msra.mxu0 %v1180
    %1218 = vmatprep.subr.mxu0 0.0
    %1219 = vmatpush1.msra.mxu0 %v1179
    %1220 = vmatprep.subr.mxu0 0.0
    %1221 = vmatpush1.msra.mxu0 %v1178
    %1222 = vmatprep.subr.mxu0 0.0
    %1223 = vmatpush1.msra.mxu0 %v1177
    %1224 = vmatprep.subr.mxu0 0.0
    %1225 = vmatpush1.msra.mxu0 %v1176
    %1226 = vmatprep.subr.mxu0 0.0
    %1227 = vmatpush2.msra.mxu0 0.0
    %1228 = vmatprep.subr.mxu0 0.0
    %1229 = vmatpush2.msra.mxu0 0.0
    %1230 = vmatprep.subr.mxu0 0.0
    %1231 = vmatpush2.msra.mxu0 0.0
    %1232 = vmatprep.subr.mxu0 0.0
    %1233 = vmatpush2.msra.mxu0 0.0
    %1234 = vmatprep.subr.mxu0 0.0
    %1235 = vmatpush2.msra.mxu0 0.0
    %1236 = vmatprep.subr.mxu0 0.0
    %1237 = vmatpush2.msra.mxu0 0.0
    %1238 = vmatprep.subr.mxu0 0.0
    %1239 = vmatpush2.msra.mxu0 0.0
    %1240 = vmatprep.subr.mxu0 0.0
    %1241 = vmatpush2.msra.mxu0 0.0
    %1242 = vmatprep.subr.mxu0 0.0
    %1243 = vmatpush2.msra.mxu0 0.0
    %1244 = vmatprep.subr.mxu0 0.0
    %1245 = vmatpush2.msra.mxu0 0.0
    %1246 = vmatprep.subr.mxu0 0.0
    %1247 = vmatpush2.msra.mxu0 0.0
    %1248 = vmatprep.subr.mxu0 0.0
    %1249 = vmatpush2.msra.mxu0 0.0
    %1250 = vmatprep.subr.mxu0 0.0
    %1251 = vmatpush2.msra.mxu0 0.0
    %1252 = vmatprep.subr.mxu0 0.0
    %1253 = vmatpush2.msra.mxu0 0.0
    %1254 = vmatprep.subr.mxu0 0.0
    %1255 = vmatpush2.msra.mxu0 0.0
    %1256 = vmatprep.subr.mxu0 0.0
    %1257 = vmatpush2.msra.mxu0 0.0
    %1258 = vmatprep.mubr.f32.mxu0 0.0
    %1259 = vmatmul.mubr.f32.gmra.mxu0 %v1192
    %v1260 = vpop.f32.mrf.mxu0
    %v1261 = vadd.f32 %v1189, %v1260
    %v1262 = vpop.f32.mrf.mxu0
    %1263 = vdwg.mxu0
    %v1264 = vmax.f32 %v1261, 0.0
    %v1265 = vld [vmem:[%s6] sm:$0xff]
    %v1266 = vld [vmem:[%s6 + $0x8] sm:$0xff]
    %v1267 = vld [vmem:[%s6 + $0x10] sm:$0xff]
    %v1268 = vld [vmem:[%s6 + $0x18] sm:$0xff]
    %v1269 = vld [vmem:[%s7] sm:$0x1]
    %v1271 = vlaneseq
    %v1272 = vshrl.u32 %v1271, 7
    %v1273 = vsub.s32 0, %v1272
    %v1274 = vrot.slane %v1269, %v1273
    %vm1276 = vcmask 261120
    %v1278 = vsel %vm1276, %v1264, 0
    %1280 = vmatprep.subr.mxu0 0.0
    %1281 = vmatpush1.msra.mxu0 0.0
    %1282 = vmatprep.subr.mxu0 0.0
    %1283 = vmatpush1.msra.mxu0 0.0
    %1284 = vmatprep.subr.mxu0 0.0
    %1285 = vmatpush1.msra.mxu0 0.0
    %1286 = vmatprep.subr.mxu0 0.0
    %1287 = vmatpush1.msra.mxu0 0.0
    %1288 = vmatprep.subr.mxu0 0.0
    %1289 = vmatpush1.msra.mxu0 0.0
    %1290 = vmatprep.subr.mxu0 0.0
    %1291 = vmatpush1.msra.mxu0 0.0
    %1292 = vmatprep.subr.mxu0 0.0
    %1293 = vmatpush1.msra.mxu0 0.0
    %1294 = vmatprep.subr.mxu0 0.0
    %1295 = vmatpush1.msra.mxu0 0.0
    %1296 = vmatprep.subr.mxu0 0.0
    %1297 = vmatpush1.msra.mxu0 0.0
    %1298 = vmatprep.subr.mxu0 0.0
    %1299 = vmatpush1.msra.mxu0 0.0
    %1300 = vmatprep.subr.mxu0 0.0
    %1301 = vmatpush1.msra.mxu0 0.0
    %1302 = vmatprep.subr.mxu0 0.0
    %1303 = vmatpush1.msra.mxu0 0.0
    %1304 = vmatprep.subr.mxu0 0.0
    %1305 = vmatpush1.msra.mxu0 %v1268
    %1306 = vmatprep.subr.mxu0 0.0
    %1307 = vmatpush1.msra.mxu0 %v1267
    %1308 = vmatprep.subr.mxu0 0.0
    %1309 = vmatpush1.msra.mxu0 %v1266
    %1310 = vmatprep.subr.mxu0 0.0
    %1311 = vmatpush1.msra.mxu0 %v1265
    %1312 = vmatprep.subr.mxu0 0.0
    %1313 = vmatpush2.msra.mxu0 0.0
    %1314 = vmatprep.subr.mxu0 0.0
    %1315 = vmatpush2.msra.mxu0 0.0
    %1316 = vmatprep.subr.mxu0 0.0
    %1317 = vmatpush2.msra.mxu0 0.0
    %1318 = vmatprep.subr.mxu0 0.0
    %1319 = vmatpush2.msra.mxu0 0.0
    %1320 = vmatprep.subr.mxu0 0.0
    %1321 = vmatpush2.msra.mxu0 0.0
    %1322 = vmatprep.subr.mxu0 0.0
    %1323 = vmatpush2.msra.mxu0 0.0
    %1324 = vmatprep.subr.mxu0 0.0
    %1325 = vmatpush2.msra.mxu0 0.0
    %1326 = vmatprep.subr.mxu0 0.0
    %1327 = vmatpush2.msra.mxu0 0.0
    %1328 = vmatprep.subr.mxu0 0.0
    %1329 = vmatpush2.msra.mxu0 0.0
    %1330 = vmatprep.subr.mxu0 0.0
    %1331 = vmatpush2.msra.mxu0 0.0
    %1332 = vmatprep.subr.mxu0 0.0
    %1333 = vmatpush2.msra.mxu0 0.0
    %1334 = vmatprep.subr.mxu0 0.0
    %1335 = vmatpush2.msra.mxu0 0.0
    %1336 = vmatprep.subr.mxu0 0.0
    %1337 = vmatpush2.msra.mxu0 0.0
    %1338 = vmatprep.subr.mxu0 0.0
    %1339 = vmatpush2.msra.mxu0 0.0
    %1340 = vmatprep.subr.mxu0 0.0
    %1341 = vmatpush2.msra.mxu0 0.0
    %1342 = vmatprep.subr.mxu0 0.0
    %1343 = vmatpush2.msra.mxu0 0.0
    %1344 = vmatprep.mubr.f32.mxu0 0.0
    %1345 = vmatmul.mubr.f32.gmra.mxu0 %v1278
    %v1346 = vpop.f32.mrf.mxu0
    %v1347 = vadd.f32 %v1274, %v1346
    %v1348 = vpop.f32.mrf.mxu0
    %1349 = vdwg.mxu0
    %v1350 = vxor.u32 %v1347, 2147483648
    %v1351 = vmul.f32 %v1350, 1.442695
    %v1352 = vpow.pop %v1351
    %v1353 = vadd.f32 %v1352, 1.0
    %v1354 = vrcp.pop %v1353
    %v1355 = vmul.f32 1.0, %v1354
    %1356 = vst [vmem:[#allocation8] sm:$0xff] %v1355
    // Predicated region
    $region42: #{tpu_custom_call.1} parent=1 // pred_check
      _
    $region43: #{tpu_custom_call.1} parent=1 // pred_check_branch
      %1358 = sbr.rel (0) target = $region45
    $region44: #{tpu_custom_call.1} parent=1 // pred_region
      %s1360 = ssub.s32 128, 128
      %1361 = vsyncadd [#allocation5], %s1360
      %s1363 = sshll.u32 [#allocation8], 4
      %s1364 = int_to_ptr.vmem [resolvable:$true] %s1363
      %1366 = dma.vmem_to_hbm [thread:$0]  %s1364, 128, %s8, [#allocation5]
    $region45: #{tpu_custom_call.1} parent=1 // pred_fallthru
      _
    // Predicated region
    $region46: #{tpu_custom_call.1} parent=1 // pred_check
      _
    $region47: #{tpu_custom_call.1} parent=1 // pred_check_branch
      %1368 = sbr.rel (0) target = $region49
    $region48: #{tpu_custom_call.1} parent=1 // pred_region
      %1369 = dma.done [#allocation5], 128
    $region49: #{tpu_custom_call.1} parent=1 // pred_fallthru
      _
    %1370 = vsyncpa [#allocation4], 1
    %1371 = vsyncpa [#allocation7], 1
    %1372 = vsyncpa [#allocation5], 1

</llo_original>
